<compile_context>
chip_gen: v5e
topology: v5e:2x2
jax: 0.10.0
libtpu: 0.0.40
codegen_flags: <defaults>
</compile_context>

<pallas_src>
import functools
import math

import jax
import jax.numpy as jnp
from jax.experimental import pallas as pl
from jax.experimental.pallas import tpu as pltpu

EPS = 1e-5          # PyTorch nn.LayerNorm default eps
NEG_INF = -1e10     # matches masked_fill(mask == 0, -1e10) in the reference
BF16_MXU = True     # feed bf16 operands into the MXU (accumulation stays f32)


def _mx(a):
    """Cast an MXU (matmul) operand; accumulation stays f32."""
    return a.astype(jnp.bfloat16) if BF16_MXU else a


def _layernorm(s, gamma, beta):
    mu = jnp.mean(s, axis=-1, keepdims=True)
    var = jnp.mean(jnp.square(s - mu), axis=-1, keepdims=True)
    return (s - mu) * jax.lax.rsqrt(var + EPS) * gamma + beta


# ----------------------------------------------------------------------------
# Kernel 1: one full encoder layer (MHA + LN + FFN + LN), one batch per step.
# ----------------------------------------------------------------------------
def _encoder_layer_kernel(x_ref, m_ref, wqkv_ref, bqkv_ref, wo_ref, bo_ref,
                          g1_ref, be1_ref, w1_ref, b1_ref, w2_ref, b2_ref,
                          g2_ref, be2_ref, o_ref, *, n_heads, scale):
    x = x_ref[0]                          # (L, D) float32
    L, D = x.shape
    dh = D // n_heads
    mask = m_ref[0]                       # (1 or L, Lk) float32 0/1

    # --- multi-head self-attention (single fused QKV GEMM) ---
    qkv = jnp.dot(_mx(x), _mx(wqkv_ref[...]),
                  preferred_element_type=jnp.float32) + bqkv_ref[...]
    q = qkv[:, 0 * D:1 * D] * (1.0 / scale)     # fold 1/sqrt(head_dim) into Q
    k = qkv[:, 1 * D:2 * D]
    v = qkv[:, 2 * D:3 * D]

    heads = []
    for h in range(n_heads):                    # static, unrolled head loop
        qh = q[:, h * dh:(h + 1) * dh]
        kh = k[:, h * dh:(h + 1) * dh]
        vh = v[:, h * dh:(h + 1) * dh]
        e = jnp.dot(qh, kh.T, preferred_element_type=jnp.float32)   # (L, Lk)
        e = jnp.where(mask < 0.5, NEG_INF, e)
        e = e - jnp.max(e, axis=-1, keepdims=True)
        p = jnp.exp(e)
        p = p * pl.reciprocal(jnp.sum(p, axis=-1, keepdims=True), approx=True)
        heads.append(jnp.dot(p, vh, preferred_element_type=jnp.float32))
    ctx = jnp.concatenate(heads, axis=-1)       # (L, D)

    attn_out = jnp.dot(_mx(ctx), _mx(wo_ref[...]),
                       preferred_element_type=jnp.float32) + bo_ref[...]
    x = _layernorm(x + attn_out, g1_ref[...], be1_ref[...])

    # --- position-wise feed-forward ---
    hdn = jnp.dot(_mx(x), _mx(w1_ref[...]),
                  preferred_element_type=jnp.float32) + b1_ref[...]
    hdn = jnp.maximum(hdn, 0.0)
    y = jnp.dot(_mx(hdn), _mx(w2_ref[...]),
                preferred_element_type=jnp.float32) + b2_ref[...]
    x = _layernorm(x + y, g2_ref[...], be2_ref[...])

    o_ref[0] = x.astype(o_ref.dtype)


def encoder_layer(p, src, mask3, n_heads):
    """src: (B, L, D); mask3: (B, 1 or L, Lk) float 0/1 -> (B, L, D)."""
    B, L, D = src.shape
    Mq, Lk = mask3.shape[1], mask3.shape[2]
    pf = p["w1"].shape[1]
    kernel = functools.partial(_encoder_layer_kernel, n_heads=n_heads,
                               scale=math.sqrt(D // n_heads))
    const2 = lambda i: (0, 0)
    return pl.pallas_call(
        kernel,
        out_shape=jax.ShapeDtypeStruct((B, L, D), jnp.float32),
        grid=(B,),
        in_specs=[
            pl.BlockSpec((1, L, D), lambda i: (i, 0, 0)),     # src
            pl.BlockSpec((1, Mq, Lk), lambda i: (i, 0, 0)),   # mask (no head bcast)
            pl.BlockSpec((D, 3 * D), const2),                 # wqkv (fused)
            pl.BlockSpec((1, 3 * D), const2),                 # bqkv
            pl.BlockSpec((D, D), const2),                     # wo
            pl.BlockSpec((1, D), const2),                     # bo
            pl.BlockSpec((1, D), const2),                     # ln1 gamma
            pl.BlockSpec((1, D), const2),                     # ln1 beta
            pl.BlockSpec((D, pf), const2),                    # w1
            pl.BlockSpec((1, pf), const2),                    # b1
            pl.BlockSpec((pf, D), const2),                    # w2
            pl.BlockSpec((1, D), const2),                     # b2
            pl.BlockSpec((1, D), const2),                     # ln2 gamma
            pl.BlockSpec((1, D), const2),                     # ln2 beta
        ],
        out_specs=pl.BlockSpec((1, L, D), lambda i: (i, 0, 0)),
        compiler_params=pltpu.CompilerParams(
            dimension_semantics=("parallel",)),
    )(src, mask3, p["wqkv"], p["bqkv"], p["wo"], p["bo"],
      p["ln1_g"], p["ln1_b"], p["w1"], p["b1"], p["w2"], p["b2"],
      p["ln2_g"], p["ln2_b"])


# ----------------------------------------------------------------------------
# Kernel 2: final fc_out linear, tiled over rows (parallel grid axis).
# ----------------------------------------------------------------------------
def _linear_kernel(x_ref, w_ref, b_ref, o_ref):
    y = jnp.dot(_mx(x_ref[...]), _mx(w_ref[...]),
                preferred_element_type=jnp.float32) + b_ref[...]
    o_ref[...] = y.astype(o_ref.dtype)


def linear(x, w, b, block_rows=512):
    """x: (M, K), w: (K, N), b: (1, N) -> (M, N)."""
    M, K = x.shape
    N = w.shape[1]
    tm = min(block_rows, M)
    return pl.pallas_call(
        _linear_kernel,
        out_shape=jax.ShapeDtypeStruct((M, N), jnp.float32),
        grid=(pl.cdiv(M, tm),),
        in_specs=[pl.BlockSpec((tm, K), lambda i: (i, 0)),
                  pl.BlockSpec((K, N), lambda i: (0, 0)),
                  pl.BlockSpec((1, N), lambda i: (0, 0))],
        out_specs=pl.BlockSpec((tm, N), lambda i: (i, 0)),
        compiler_params=pltpu.CompilerParams(
            dimension_semantics=("parallel",)),
    )(x, w, b)


# ----------------------------------------------------------------------------
# Model assembly
# ----------------------------------------------------------------------------
def encoder_forward(params, src, src_mask, n_heads):
    B, L, D = src.shape
    # src_mask: (B, 1, 1, Lk) or (B, 1, Lq, Lk) -> (B, 1 or Lq, Lk).
    mask3 = src_mask.reshape(B, src_mask.shape[-2], src_mask.shape[-1])
    mask3 = mask3.astype(jnp.float32)
    x = src
    for lp in params["layers"]:
        x = encoder_layer(lp, x, mask3, n_heads)
    out = linear(x.reshape(B * L, D), params["out_w"], params["out_b"])
    return out.reshape(B, L, -1)


# ----------------------------------------------------------------------------
# Deterministic parameter construction (PyTorch nn.Linear-style init)
# ----------------------------------------------------------------------------
def _lin_params(key, d_in, d_out):
    kw, kb = jax.random.split(key)
    bound = 1.0 / math.sqrt(d_in)
    w = jax.random.uniform(kw, (d_in, d_out), jnp.float32, -bound, bound)
    b = jax.random.uniform(kb, (1, d_out), jnp.float32, -bound, bound)
    return w, b


def make_params(key, hid_dim, n_layers, pf_dim, output_dim):
    D = hid_dim
    keys = jax.random.split(key, 1 + n_layers)
    params = {}
    params["out_w"], params["out_b"] = _lin_params(keys[0], D, output_dim)
    layers = []
    for li in range(n_layers):
        lk = jax.random.split(keys[1 + li], 6)
        wq, bq = _lin_params(lk[0], D, D)
        wk, bk = _lin_params(lk[1], D, D)
        wv, bv = _lin_params(lk[2], D, D)
        wo, bo = _lin_params(lk[3], D, D)
        w1, b1 = _lin_params(lk[4], D, pf_dim)
        w2, b2 = _lin_params(lk[5], pf_dim, D)
        layers.append(dict(
            # QKV projections fused into one (D, 3D) weight at build time.
            wqkv=jnp.concatenate([wq, wk, wv], axis=1),
            bqkv=jnp.concatenate([bq, bk, bv], axis=1),
            wo=wo, bo=bo, w1=w1, b1=b1, w2=w2, b2=b2,
            ln1_g=jnp.ones((1, D), jnp.float32), ln1_b=jnp.zeros((1, D), jnp.float32),
            ln2_g=jnp.ones((1, D), jnp.float32), ln2_b=jnp.zeros((1, D), jnp.float32),
        ))
    params["layers"] = layers
    return params


if __name__ == "__main__":
    # Small shapes consistent with the module.
    batch = 2
    seq_len = 8
    hid_dim = 32
    n_heads = 4          # head_dim = 8
    pf_dim = 64
    n_layers = 2
    output_dim = 8

    key = jax.random.PRNGKey(0)
    k_src, k_par = jax.random.split(key, 2)

    src = jax.random.normal(k_src, (batch, seq_len, hid_dim), jnp.float32)
    # Standard source-padding mask: (B, 1, 1, Lk); mask out the last two
    # positions of the second batch element to exercise the masking path.
    src_mask = jnp.ones((batch, 1, 1, seq_len), jnp.float32)
    src_mask = src_mask.at[1, :, :, -2:].set(0.0)

    params = make_params(k_par, hid_dim, n_layers, pf_dim, output_dim)

    out = encoder_forward(params, src, src_mask, n_heads)
    jax.block_until_ready(out)
    assert out.shape == (batch, seq_len, output_dim)
    assert bool(jnp.all(jnp.isfinite(out)))
    print("KERNEL_OK")
</pallas_src>

<mosaic_0001>
module attributes {stable_mosaic.version = 11 : i64} {
  func.func @_encoder_layer_kernel(%arg0: i32, %arg1: memref<1x8x32xf32, #tpu.memory_space<vmem>>, %arg2: memref<1x1x8xf32, #tpu.memory_space<vmem>>, %arg3: memref<32x96xf32, #tpu.memory_space<vmem>>, %arg4: memref<1x96xf32, #tpu.memory_space<vmem>>, %arg5: memref<32x32xf32, #tpu.memory_space<vmem>>, %arg6: memref<1x32xf32, #tpu.memory_space<vmem>>, %arg7: memref<1x32xf32, #tpu.memory_space<vmem>>, %arg8: memref<1x32xf32, #tpu.memory_space<vmem>>, %arg9: memref<32x64xf32, #tpu.memory_space<vmem>>, %arg10: memref<1x64xf32, #tpu.memory_space<vmem>>, %arg11: memref<64x32xf32, #tpu.memory_space<vmem>>, %arg12: memref<1x32xf32, #tpu.memory_space<vmem>>, %arg13: memref<1x32xf32, #tpu.memory_space<vmem>>, %arg14: memref<1x32xf32, #tpu.memory_space<vmem>>, %arg15: memref<1x8x32xf32, #tpu.memory_space<vmem>>) attributes {dimension_semantics = [#tpu.dimension_semantics<parallel>], iteration_bounds = array<i64: 2>, scalar_prefetch = 0 : i64, scratch_operands = 0 : i64, tpu.core_type = #tpu.core_type<tc>, window_params = [{transform_indices = @transform_0, window_bounds = array<i64: 1, 8, 32>}, {transform_indices = @transform_1, window_bounds = array<i64: 1, 1, 8>}, {pipeline_mode = #tpu.pipeline_mode<synchronous>, transform_indices = @transform_2, window_bounds = array<i64: 32, 96>}, {pipeline_mode = #tpu.pipeline_mode<synchronous>, transform_indices = @transform_3, window_bounds = array<i64: 1, 96>}, {pipeline_mode = #tpu.pipeline_mode<synchronous>, transform_indices = @transform_4, window_bounds = array<i64: 32, 32>}, {pipeline_mode = #tpu.pipeline_mode<synchronous>, transform_indices = @transform_5, window_bounds = array<i64: 1, 32>}, {pipeline_mode = #tpu.pipeline_mode<synchronous>, transform_indices = @transform_6, window_bounds = array<i64: 1, 32>}, {pipeline_mode = #tpu.pipeline_mode<synchronous>, transform_indices = @transform_7, window_bounds = array<i64: 1, 32>}, {pipeline_mode = #tpu.pipeline_mode<synchronous>, transform_indices = @transform_8, window_bounds = array<i64: 32, 64>}, {pipeline_mode = #tpu.pipeline_mode<synchronous>, transform_indices = @transform_9, window_bounds = array<i64: 1, 64>}, {pipeline_mode = #tpu.pipeline_mode<synchronous>, transform_indices = @transform_10, window_bounds = array<i64: 64, 32>}, {pipeline_mode = #tpu.pipeline_mode<synchronous>, transform_indices = @transform_11, window_bounds = array<i64: 1, 32>}, {pipeline_mode = #tpu.pipeline_mode<synchronous>, transform_indices = @transform_12, window_bounds = array<i64: 1, 32>}, {pipeline_mode = #tpu.pipeline_mode<synchronous>, transform_indices = @transform_13, window_bounds = array<i64: 1, 32>}, {transform_indices = @transform_14, window_bounds = array<i64: 1, 8, 32>}]} {
    %c0 = arith.constant 0 : index
    %c0_0 = arith.constant 0 : index
    %c0_1 = arith.constant 0 : index
    %0 = vector.load %arg1[%c0, %c0_0, %c0_1] : memref<1x8x32xf32, #tpu.memory_space<vmem>>, vector<1x8x32xf32>
    %1 = vector.shape_cast %0 : vector<1x8x32xf32> to vector<8x32xf32>
    %c0_2 = arith.constant 0 : index
    %c0_3 = arith.constant 0 : index
    %c0_4 = arith.constant 0 : index
    %2 = vector.load %arg2[%c0_2, %c0_3, %c0_4] : memref<1x1x8xf32, #tpu.memory_space<vmem>>, vector<1x1x8xf32>
    %3 = vector.shape_cast %2 : vector<1x1x8xf32> to vector<1x8xf32>
    %4 = arith.truncf %1 : vector<8x32xf32> to vector<8x32xbf16>
    %c0_5 = arith.constant 0 : index
    %c0_6 = arith.constant 0 : index
    %5 = vector.load %arg3[%c0_5, %c0_6] : memref<32x96xf32, #tpu.memory_space<vmem>>, vector<32x96xf32>
    %6 = arith.truncf %5 : vector<32x96xf32> to vector<32x96xbf16>
    %cst = arith.constant dense<0.000000e+00> : vector<8x96xf32>
    %7 = tpu.matmul %4, %6, %cst {dimension_numbers = #tpu.dot_dimension_numbers<[1], [0], [0], [1], [0, 0, 1, 1], [], []>} : vector<8x32xbf16>, vector<32x96xbf16>, vector<8x96xf32> -> vector<8x96xf32>
    %c0_7 = arith.constant 0 : index
    %c0_8 = arith.constant 0 : index
    %8 = vector.load %arg4[%c0_7, %c0_8] : memref<1x96xf32, #tpu.memory_space<vmem>>, vector<1x96xf32>
    %9 = vector.broadcast %8 : vector<1x96xf32> to vector<8x96xf32>
    %10 = arith.addf %7, %9 : vector<8x96xf32>
    %11 = vector.extract_strided_slice %10 {offsets = [0, 0], sizes = [8, 32], strides = [1, 1]} : vector<8x96xf32> to vector<8x32xf32>
    %cst_9 = arith.constant 0.353553385 : f32
    %12 = vector.broadcast %cst_9 : f32 to vector<8x32xf32>
    %13 = arith.mulf %11, %12 : vector<8x32xf32>
    %14 = vector.extract_strided_slice %10 {offsets = [0, 32], sizes = [8, 32], strides = [1, 1]} : vector<8x96xf32> to vector<8x32xf32>
    %15 = vector.extract_strided_slice %10 {offsets = [0, 64], sizes = [8, 32], strides = [1, 1]} : vector<8x96xf32> to vector<8x32xf32>
    %16 = vector.extract_strided_slice %13 {offsets = [0, 0], sizes = [8, 8], strides = [1, 1]} : vector<8x32xf32> to vector<8x8xf32>
    %17 = vector.extract_strided_slice %14 {offsets = [0, 0], sizes = [8, 8], strides = [1, 1]} : vector<8x32xf32> to vector<8x8xf32>
    %18 = vector.extract_strided_slice %15 {offsets = [0, 0], sizes = [8, 8], strides = [1, 1]} : vector<8x32xf32> to vector<8x8xf32>
    %19 = tpu.transpose %17, [1, 0] : vector<8x8xf32> -> vector<8x8xf32>
    %cst_10 = arith.constant dense<0.000000e+00> : vector<8x8xf32>
    %20 = tpu.matmul %16, %19, %cst_10 {dimension_numbers = #tpu.dot_dimension_numbers<[1], [0], [0], [1], [0, 0, 1, 1], [], []>} : vector<8x8xf32>, vector<8x8xf32>, vector<8x8xf32> -> vector<8x8xf32>
    %cst_11 = arith.constant 5.000000e-01 : f32
    %21 = vector.broadcast %cst_11 : f32 to vector<1x8xf32>
    %22 = arith.cmpf olt, %3, %21 : vector<1x8xf32>
    %cst_12 = arith.constant -1.000000e+10 : f32
    %23 = vector.shape_cast %22 : vector<1x8xi1> to vector<1x8xi1>
    %24 = vector.broadcast %23 : vector<1x8xi1> to vector<8x8xi1>
    %25 = vector.broadcast %cst_12 : f32 to vector<8x8xf32>
    %26 = arith.select %24, %25, %20 : vector<8x8xi1>, vector<8x8xf32>
    %cst_13 = arith.constant dense<0xFF800000> : vector<8xf32>
    %27 = vector.multi_reduction <maximumf>, %26, %cst_13 [1] : vector<8x8xf32> to vector<8xf32>
    %28 = vector.shape_cast %27 : vector<8xf32> to vector<8x1xf32>
    %29 = vector.broadcast %28 : vector<8x1xf32> to vector<8x8xf32>
    %30 = arith.subf %26, %29 : vector<8x8xf32>
    %31 = math.exp %30 : vector<8x8xf32>
    %cst_14 = arith.constant dense<0.000000e+00> : vector<8xf32>
    %32 = vector.multi_reduction <add>, %31, %cst_14 [1] : vector<8x8xf32> to vector<8xf32>
    %33 = vector.shape_cast %32 : vector<8xf32> to vector<8x1xf32>
    %34 = tpu.reciprocal %33 {approx = true} : vector<8x1xf32> -> vector<8x1xf32>
    %35 = vector.broadcast %34 : vector<8x1xf32> to vector<8x8xf32>
    %36 = arith.mulf %31, %35 : vector<8x8xf32>
    %cst_15 = arith.constant dense<0.000000e+00> : vector<8x8xf32>
    %37 = tpu.matmul %36, %18, %cst_15 {dimension_numbers = #tpu.dot_dimension_numbers<[1], [0], [0], [1], [0, 0, 1, 1], [], []>} : vector<8x8xf32>, vector<8x8xf32>, vector<8x8xf32> -> vector<8x8xf32>
    %38 = vector.extract_strided_slice %13 {offsets = [0, 8], sizes = [8, 8], strides = [1, 1]} : vector<8x32xf32> to vector<8x8xf32>
    %39 = vector.extract_strided_slice %14 {offsets = [0, 8], sizes = [8, 8], strides = [1, 1]} : vector<8x32xf32> to vector<8x8xf32>
    %40 = vector.extract_strided_slice %15 {offsets = [0, 8], sizes = [8, 8], strides = [1, 1]} : vector<8x32xf32> to vector<8x8xf32>
    %41 = tpu.transpose %39, [1, 0] : vector<8x8xf32> -> vector<8x8xf32>
    %cst_16 = arith.constant dense<0.000000e+00> : vector<8x8xf32>
    %42 = tpu.matmul %38, %41, %cst_16 {dimension_numbers = #tpu.dot_dimension_numbers<[1], [0], [0], [1], [0, 0, 1, 1], [], []>} : vector<8x8xf32>, vector<8x8xf32>, vector<8x8xf32> -> vector<8x8xf32>
    %cst_17 = arith.constant 5.000000e-01 : f32
    %43 = vector.broadcast %cst_17 : f32 to vector<1x8xf32>
    %44 = arith.cmpf olt, %3, %43 : vector<1x8xf32>
    %cst_18 = arith.constant -1.000000e+10 : f32
    %45 = vector.shape_cast %44 : vector<1x8xi1> to vector<1x8xi1>
    %46 = vector.broadcast %45 : vector<1x8xi1> to vector<8x8xi1>
    %47 = vector.broadcast %cst_18 : f32 to vector<8x8xf32>
    %48 = arith.select %46, %47, %42 : vector<8x8xi1>, vector<8x8xf32>
    %cst_19 = arith.constant dense<0xFF800000> : vector<8xf32>
    %49 = vector.multi_reduction <maximumf>, %48, %cst_19 [1] : vector<8x8xf32> to vector<8xf32>
    %50 = vector.shape_cast %49 : vector<8xf32> to vector<8x1xf32>
    %51 = vector.broadcast %50 : vector<8x1xf32> to vector<8x8xf32>
    %52 = arith.subf %48, %51 : vector<8x8xf32>
    %53 = math.exp %52 : vector<8x8xf32>
    %cst_20 = arith.constant dense<0.000000e+00> : vector<8xf32>
    %54 = vector.multi_reduction <add>, %53, %cst_20 [1] : vector<8x8xf32> to vector<8xf32>
    %55 = vector.shape_cast %54 : vector<8xf32> to vector<8x1xf32>
    %56 = tpu.reciprocal %55 {approx = true} : vector<8x1xf32> -> vector<8x1xf32>
    %57 = vector.broadcast %56 : vector<8x1xf32> to vector<8x8xf32>
    %58 = arith.mulf %53, %57 : vector<8x8xf32>
    %cst_21 = arith.constant dense<0.000000e+00> : vector<8x8xf32>
    %59 = tpu.matmul %58, %40, %cst_21 {dimension_numbers = #tpu.dot_dimension_numbers<[1], [0], [0], [1], [0, 0, 1, 1], [], []>} : vector<8x8xf32>, vector<8x8xf32>, vector<8x8xf32> -> vector<8x8xf32>
    %60 = vector.extract_strided_slice %13 {offsets = [0, 16], sizes = [8, 8], strides = [1, 1]} : vector<8x32xf32> to vector<8x8xf32>
    %61 = vector.extract_strided_slice %14 {offsets = [0, 16], sizes = [8, 8], strides = [1, 1]} : vector<8x32xf32> to vector<8x8xf32>
    %62 = vector.extract_strided_slice %15 {offsets = [0, 16], sizes = [8, 8], strides = [1, 1]} : vector<8x32xf32> to vector<8x8xf32>
    %63 = tpu.transpose %61, [1, 0] : vector<8x8xf32> -> vector<8x8xf32>
    %cst_22 = arith.constant dense<0.000000e+00> : vector<8x8xf32>
    %64 = tpu.matmul %60, %63, %cst_22 {dimension_numbers = #tpu.dot_dimension_numbers<[1], [0], [0], [1], [0, 0, 1, 1], [], []>} : vector<8x8xf32>, vector<8x8xf32>, vector<8x8xf32> -> vector<8x8xf32>
    %cst_23 = arith.constant 5.000000e-01 : f32
    %65 = vector.broadcast %cst_23 : f32 to vector<1x8xf32>
    %66 = arith.cmpf olt, %3, %65 : vector<1x8xf32>
    %cst_24 = arith.constant -1.000000e+10 : f32
    %67 = vector.shape_cast %66 : vector<1x8xi1> to vector<1x8xi1>
    %68 = vector.broadcast %67 : vector<1x8xi1> to vector<8x8xi1>
    %69 = vector.broadcast %cst_24 : f32 to vector<8x8xf32>
    %70 = arith.select %68, %69, %64 : vector<8x8xi1>, vector<8x8xf32>
    %cst_25 = arith.constant dense<0xFF800000> : vector<8xf32>
    %71 = vector.multi_reduction <maximumf>, %70, %cst_25 [1] : vector<8x8xf32> to vector<8xf32>
    %72 = vector.shape_cast %71 : vector<8xf32> to vector<8x1xf32>
    %73 = vector.broadcast %72 : vector<8x1xf32> to vector<8x8xf32>
    %74 = arith.subf %70, %73 : vector<8x8xf32>
    %75 = math.exp %74 : vector<8x8xf32>
    %cst_26 = arith.constant dense<0.000000e+00> : vector<8xf32>
    %76 = vector.multi_reduction <add>, %75, %cst_26 [1] : vector<8x8xf32> to vector<8xf32>
    %77 = vector.shape_cast %76 : vector<8xf32> to vector<8x1xf32>
    %78 = tpu.reciprocal %77 {approx = true} : vector<8x1xf32> -> vector<8x1xf32>
    %79 = vector.broadcast %78 : vector<8x1xf32> to vector<8x8xf32>
    %80 = arith.mulf %75, %79 : vector<8x8xf32>
    %cst_27 = arith.constant dense<0.000000e+00> : vector<8x8xf32>
    %81 = tpu.matmul %80, %62, %cst_27 {dimension_numbers = #tpu.dot_dimension_numbers<[1], [0], [0], [1], [0, 0, 1, 1], [], []>} : vector<8x8xf32>, vector<8x8xf32>, vector<8x8xf32> -> vector<8x8xf32>
    %82 = vector.extract_strided_slice %13 {offsets = [0, 24], sizes = [8, 8], strides = [1, 1]} : vector<8x32xf32> to vector<8x8xf32>
    %83 = vector.extract_strided_slice %14 {offsets = [0, 24], sizes = [8, 8], strides = [1, 1]} : vector<8x32xf32> to vector<8x8xf32>
    %84 = vector.extract_strided_slice %15 {offsets = [0, 24], sizes = [8, 8], strides = [1, 1]} : vector<8x32xf32> to vector<8x8xf32>
    %85 = tpu.transpose %83, [1, 0] : vector<8x8xf32> -> vector<8x8xf32>
    %cst_28 = arith.constant dense<0.000000e+00> : vector<8x8xf32>
    %86 = tpu.matmul %82, %85, %cst_28 {dimension_numbers = #tpu.dot_dimension_numbers<[1], [0], [0], [1], [0, 0, 1, 1], [], []>} : vector<8x8xf32>, vector<8x8xf32>, vector<8x8xf32> -> vector<8x8xf32>
    %cst_29 = arith.constant 5.000000e-01 : f32
    %87 = vector.broadcast %cst_29 : f32 to vector<1x8xf32>
    %88 = arith.cmpf olt, %3, %87 : vector<1x8xf32>
    %cst_30 = arith.constant -1.000000e+10 : f32
    %89 = vector.shape_cast %88 : vector<1x8xi1> to vector<1x8xi1>
    %90 = vector.broadcast %89 : vector<1x8xi1> to vector<8x8xi1>
    %91 = vector.broadcast %cst_30 : f32 to vector<8x8xf32>
    %92 = arith.select %90, %91, %86 : vector<8x8xi1>, vector<8x8xf32>
    %cst_31 = arith.constant dense<0xFF800000> : vector<8xf32>
    %93 = vector.multi_reduction <maximumf>, %92, %cst_31 [1] : vector<8x8xf32> to vector<8xf32>
    %94 = vector.shape_cast %93 : vector<8xf32> to vector<8x1xf32>
    %95 = vector.broadcast %94 : vector<8x1xf32> to vector<8x8xf32>
    %96 = arith.subf %92, %95 : vector<8x8xf32>
    %97 = math.exp %96 : vector<8x8xf32>
    %cst_32 = arith.constant dense<0.000000e+00> : vector<8xf32>
    %98 = vector.multi_reduction <add>, %97, %cst_32 [1] : vector<8x8xf32> to vector<8xf32>
    %99 = vector.shape_cast %98 : vector<8xf32> to vector<8x1xf32>
    %100 = tpu.reciprocal %99 {approx = true} : vector<8x1xf32> -> vector<8x1xf32>
    %101 = vector.broadcast %100 : vector<8x1xf32> to vector<8x8xf32>
    %102 = arith.mulf %97, %101 : vector<8x8xf32>
    %cst_33 = arith.constant dense<0.000000e+00> : vector<8x8xf32>
    %103 = tpu.matmul %102, %84, %cst_33 {dimension_numbers = #tpu.dot_dimension_numbers<[1], [0], [0], [1], [0, 0, 1, 1], [], []>} : vector<8x8xf32>, vector<8x8xf32>, vector<8x8xf32> -> vector<8x8xf32>
    %104 = tpu.concatenate %37, %59, %81, %103 in 1 : vector<8x8xf32>, vector<8x8xf32>, vector<8x8xf32>, vector<8x8xf32> -> vector<8x32xf32>
    %105 = arith.truncf %104 : vector<8x32xf32> to vector<8x32xbf16>
    %c0_34 = arith.constant 0 : index
    %c0_35 = arith.constant 0 : index
    %106 = vector.load %arg5[%c0_34, %c0_35] : memref<32x32xf32, #tpu.memory_space<vmem>>, vector<32x32xf32>
    %107 = arith.truncf %106 : vector<32x32xf32> to vector<32x32xbf16>
    %cst_36 = arith.constant dense<0.000000e+00> : vector<8x32xf32>
    %108 = tpu.matmul %105, %107, %cst_36 {dimension_numbers = #tpu.dot_dimension_numbers<[1], [0], [0], [1], [0, 0, 1, 1], [], []>} : vector<8x32xbf16>, vector<32x32xbf16>, vector<8x32xf32> -> vector<8x32xf32>
    %c0_37 = arith.constant 0 : index
    %c0_38 = arith.constant 0 : index
    %109 = vector.load %arg6[%c0_37, %c0_38] : memref<1x32xf32, #tpu.memory_space<vmem>>, vector<1x32xf32>
    %110 = vector.broadcast %109 : vector<1x32xf32> to vector<8x32xf32>
    %111 = arith.addf %108, %110 : vector<8x32xf32>
    %112 = arith.addf %1, %111 : vector<8x32xf32>
    %c0_39 = arith.constant 0 : index
    %c0_40 = arith.constant 0 : index
    %113 = vector.load %arg7[%c0_39, %c0_40] : memref<1x32xf32, #tpu.memory_space<vmem>>, vector<1x32xf32>
    %c0_41 = arith.constant 0 : index
    %c0_42 = arith.constant 0 : index
    %114 = vector.load %arg8[%c0_41, %c0_42] : memref<1x32xf32, #tpu.memory_space<vmem>>, vector<1x32xf32>
    %cst_43 = arith.constant dense<0.000000e+00> : vector<8xf32>
    %115 = vector.multi_reduction <add>, %112, %cst_43 [1] : vector<8x32xf32> to vector<8xf32>
    %116 = vector.shape_cast %115 : vector<8xf32> to vector<8x1xf32>
    %cst_44 = arith.constant 3.200000e+01 : f32
    %117 = vector.broadcast %cst_44 : f32 to vector<8x1xf32>
    %118 = arith.divf %116, %117 : vector<8x1xf32>
    %119 = vector.broadcast %118 : vector<8x1xf32> to vector<8x32xf32>
    %120 = arith.subf %112, %119 : vector<8x32xf32>
    %121 = arith.mulf %120, %120 : vector<8x32xf32>
    %cst_45 = arith.constant dense<0.000000e+00> : vector<8xf32>
    %122 = vector.multi_reduction <add>, %121, %cst_45 [1] : vector<8x32xf32> to vector<8xf32>
    %123 = vector.shape_cast %122 : vector<8xf32> to vector<8x1xf32>
    %cst_46 = arith.constant 3.200000e+01 : f32
    %124 = vector.broadcast %cst_46 : f32 to vector<8x1xf32>
    %125 = arith.divf %123, %124 : vector<8x1xf32>
    %126 = vector.broadcast %118 : vector<8x1xf32> to vector<8x32xf32>
    %127 = arith.subf %112, %126 : vector<8x32xf32>
    %cst_47 = arith.constant 9.99999974E-6 : f32
    %128 = vector.broadcast %cst_47 : f32 to vector<8x1xf32>
    %129 = arith.addf %125, %128 : vector<8x1xf32>
    %130 = math.rsqrt %129 : vector<8x1xf32>
    %131 = vector.broadcast %130 : vector<8x1xf32> to vector<8x32xf32>
    %132 = arith.mulf %127, %131 : vector<8x32xf32>
    %133 = vector.broadcast %113 : vector<1x32xf32> to vector<8x32xf32>
    %134 = arith.mulf %132, %133 : vector<8x32xf32>
    %135 = vector.broadcast %114 : vector<1x32xf32> to vector<8x32xf32>
    %136 = arith.addf %134, %135 : vector<8x32xf32>
    %137 = arith.truncf %136 : vector<8x32xf32> to vector<8x32xbf16>
    %c0_48 = arith.constant 0 : index
    %c0_49 = arith.constant 0 : index
    %138 = vector.load %arg9[%c0_48, %c0_49] : memref<32x64xf32, #tpu.memory_space<vmem>>, vector<32x64xf32>
    %139 = arith.truncf %138 : vector<32x64xf32> to vector<32x64xbf16>
    %cst_50 = arith.constant dense<0.000000e+00> : vector<8x64xf32>
    %140 = tpu.matmul %137, %139, %cst_50 {dimension_numbers = #tpu.dot_dimension_numbers<[1], [0], [0], [1], [0, 0, 1, 1], [], []>} : vector<8x32xbf16>, vector<32x64xbf16>, vector<8x64xf32> -> vector<8x64xf32>
    %c0_51 = arith.constant 0 : index
    %c0_52 = arith.constant 0 : index
    %141 = vector.load %arg10[%c0_51, %c0_52] : memref<1x64xf32, #tpu.memory_space<vmem>>, vector<1x64xf32>
    %142 = vector.broadcast %141 : vector<1x64xf32> to vector<8x64xf32>
    %143 = arith.addf %140, %142 : vector<8x64xf32>
    %cst_53 = arith.constant 0.000000e+00 : f32
    %144 = vector.broadcast %cst_53 : f32 to vector<8x64xf32>
    %145 = arith.maximumf %143, %144 : vector<8x64xf32>
    %146 = arith.truncf %145 : vector<8x64xf32> to vector<8x64xbf16>
    %c0_54 = arith.constant 0 : index
    %c0_55 = arith.constant 0 : index
    %147 = vector.load %arg11[%c0_54, %c0_55] : memref<64x32xf32, #tpu.memory_space<vmem>>, vector<64x32xf32>
    %148 = arith.truncf %147 : vector<64x32xf32> to vector<64x32xbf16>
    %cst_56 = arith.constant dense<0.000000e+00> : vector<8x32xf32>
    %149 = tpu.matmul %146, %148, %cst_56 {dimension_numbers = #tpu.dot_dimension_numbers<[1], [0], [0], [1], [0, 0, 1, 1], [], []>} : vector<8x64xbf16>, vector<64x32xbf16>, vector<8x32xf32> -> vector<8x32xf32>
    %c0_57 = arith.constant 0 : index
    %c0_58 = arith.constant 0 : index
    %150 = vector.load %arg12[%c0_57, %c0_58] : memref<1x32xf32, #tpu.memory_space<vmem>>, vector<1x32xf32>
    %151 = vector.broadcast %150 : vector<1x32xf32> to vector<8x32xf32>
    %152 = arith.addf %149, %151 : vector<8x32xf32>
    %153 = arith.addf %136, %152 : vector<8x32xf32>
    %c0_59 = arith.constant 0 : index
    %c0_60 = arith.constant 0 : index
    %154 = vector.load %arg13[%c0_59, %c0_60] : memref<1x32xf32, #tpu.memory_space<vmem>>, vector<1x32xf32>
    %c0_61 = arith.constant 0 : index
    %c0_62 = arith.constant 0 : index
    %155 = vector.load %arg14[%c0_61, %c0_62] : memref<1x32xf32, #tpu.memory_space<vmem>>, vector<1x32xf32>
    %cst_63 = arith.constant dense<0.000000e+00> : vector<8xf32>
    %156 = vector.multi_reduction <add>, %153, %cst_63 [1] : vector<8x32xf32> to vector<8xf32>
    %157 = vector.shape_cast %156 : vector<8xf32> to vector<8x1xf32>
    %cst_64 = arith.constant 3.200000e+01 : f32
    %158 = vector.broadcast %cst_64 : f32 to vector<8x1xf32>
    %159 = arith.divf %157, %158 : vector<8x1xf32>
    %160 = vector.broadcast %159 : vector<8x1xf32> to vector<8x32xf32>
    %161 = arith.subf %153, %160 : vector<8x32xf32>
    %162 = arith.mulf %161, %161 : vector<8x32xf32>
    %cst_65 = arith.constant dense<0.000000e+00> : vector<8xf32>
    %163 = vector.multi_reduction <add>, %162, %cst_65 [1] : vector<8x32xf32> to vector<8xf32>
    %164 = vector.shape_cast %163 : vector<8xf32> to vector<8x1xf32>
    %cst_66 = arith.constant 3.200000e+01 : f32
    %165 = vector.broadcast %cst_66 : f32 to vector<8x1xf32>
    %166 = arith.divf %164, %165 : vector<8x1xf32>
    %167 = vector.broadcast %159 : vector<8x1xf32> to vector<8x32xf32>
    %168 = arith.subf %153, %167 : vector<8x32xf32>
    %cst_67 = arith.constant 9.99999974E-6 : f32
    %169 = vector.broadcast %cst_67 : f32 to vector<8x1xf32>
    %170 = arith.addf %166, %169 : vector<8x1xf32>
    %171 = math.rsqrt %170 : vector<8x1xf32>
    %172 = vector.broadcast %171 : vector<8x1xf32> to vector<8x32xf32>
    %173 = arith.mulf %168, %172 : vector<8x32xf32>
    %174 = vector.broadcast %154 : vector<1x32xf32> to vector<8x32xf32>
    %175 = arith.mulf %173, %174 : vector<8x32xf32>
    %176 = vector.broadcast %155 : vector<1x32xf32> to vector<8x32xf32>
    %177 = arith.addf %175, %176 : vector<8x32xf32>
    %c0_68 = arith.constant 0 : index
    %c0_69 = arith.constant 0 : index
    %c0_70 = arith.constant 0 : index
    %178 = vector.load %arg15[%c0_68, %c0_69, %c0_70] : memref<1x8x32xf32, #tpu.memory_space<vmem>>, vector<1x8x32xf32>
    %179 = vector.shape_cast %178 : vector<1x8x32xf32> to vector<8x32xf32>
    %180 = vector.shape_cast %177 : vector<8x32xf32> to vector<1x8x32xf32>
    tpu.vector_store %arg15[%c0_68, %c0_69, %c0_70], %180 {strides = array<i32>} : memref<1x8x32xf32, #tpu.memory_space<vmem>>, vector<1x8x32xf32>,
    return
  }
  func.func @transform_0(%arg0: i32) -> (i32, i32, i32) {
    %c0_i32 = arith.constant 0 : i32
    %c0_i32_0 = arith.constant 0 : i32
    %c0_i32_1 = arith.constant 0 : i32
    return %arg0, %c0_i32, %c0_i32_0 : i32, i32, i32
  }
  func.func @transform_1(%arg0: i32) -> (i32, i32, i32) {
    %c0_i32 = arith.constant 0 : i32
    %c0_i32_0 = arith.constant 0 : i32
    %c0_i32_1 = arith.constant 0 : i32
    return %arg0, %c0_i32, %c0_i32_0 : i32, i32, i32
  }
  func.func @transform_2(%arg0: i32) -> (i32, i32) {
    %c0_i32 = arith.constant 0 : i32
    %c0_i32_0 = arith.constant 0 : i32
    %c0_i32_1 = arith.constant 0 : i32
    return %c0_i32, %c0_i32_0 : i32, i32
  }
  func.func @transform_3(%arg0: i32) -> (i32, i32) {
    %c0_i32 = arith.constant 0 : i32
    %c0_i32_0 = arith.constant 0 : i32
    %c0_i32_1 = arith.constant 0 : i32
    return %c0_i32, %c0_i32_0 : i32, i32
  }
  func.func @transform_4(%arg0: i32) -> (i32, i32) {
    %c0_i32 = arith.constant 0 : i32
    %c0_i32_0 = arith.constant 0 : i32
    %c0_i32_1 = arith.constant 0 : i32
    return %c0_i32, %c0_i32_0 : i32, i32
  }
  func.func @transform_5(%arg0: i32) -> (i32, i32) {
    %c0_i32 = arith.constant 0 : i32
    %c0_i32_0 = arith.constant 0 : i32
    %c0_i32_1 = arith.constant 0 : i32
    return %c0_i32, %c0_i32_0 : i32, i32
  }
  func.func @transform_6(%arg0: i32) -> (i32, i32) {
    %c0_i32 = arith.constant 0 : i32
    %c0_i32_0 = arith.constant 0 : i32
    %c0_i32_1 = arith.constant 0 : i32
    return %c0_i32, %c0_i32_0 : i32, i32
  }
  func.func @transform_7(%arg0: i32) -> (i32, i32) {
    %c0_i32 = arith.constant 0 : i32
    %c0_i32_0 = arith.constant 0 : i32
    %c0_i32_1 = arith.constant 0 : i32
    return %c0_i32, %c0_i32_0 : i32, i32
  }
  func.func @transform_8(%arg0: i32) -> (i32, i32) {
    %c0_i32 = arith.constant 0 : i32
    %c0_i32_0 = arith.constant 0 : i32
    %c0_i32_1 = arith.constant 0 : i32
    return %c0_i32, %c0_i32_0 : i32, i32
  }
  func.func @transform_9(%arg0: i32) -> (i32, i32) {
    %c0_i32 = arith.constant 0 : i32
    %c0_i32_0 = arith.constant 0 : i32
    %c0_i32_1 = arith.constant 0 : i32
    return %c0_i32, %c0_i32_0 : i32, i32
  }
  func.func @transform_10(%arg0: i32) -> (i32, i32) {
    %c0_i32 = arith.constant 0 : i32
    %c0_i32_0 = arith.constant 0 : i32
    %c0_i32_1 = arith.constant 0 : i32
    return %c0_i32, %c0_i32_0 : i32, i32
  }
  func.func @transform_11(%arg0: i32) -> (i32, i32) {
    %c0_i32 = arith.constant 0 : i32
    %c0_i32_0 = arith.constant 0 : i32
    %c0_i32_1 = arith.constant 0 : i32
    return %c0_i32, %c0_i32_0 : i32, i32
  }
  func.func @transform_12(%arg0: i32) -> (i32, i32) {
    %c0_i32 = arith.constant 0 : i32
    %c0_i32_0 = arith.constant 0 : i32
    %c0_i32_1 = arith.constant 0 : i32
    return %c0_i32, %c0_i32_0 : i32, i32
  }
  func.func @transform_13(%arg0: i32) -> (i32, i32) {
    %c0_i32 = arith.constant 0 : i32
    %c0_i32_0 = arith.constant 0 : i32
    %c0_i32_1 = arith.constant 0 : i32
    return %c0_i32, %c0_i32_0 : i32, i32
  }
  func.func @transform_14(%arg0: i32) -> (i32, i32, i32) {
    %c0_i32 = arith.constant 0 : i32
    %c0_i32_0 = arith.constant 0 : i32
    %c0_i32_1 = arith.constant 0 : i32
    return %arg0, %c0_i32, %c0_i32_0 : i32, i32, i32
  }
}

</mosaic_0001>

<llo_original>
// kernel: tpu_custom_call.1
$region0: #{tpu_custom_call.1}
  #allocation0 [shape = 'u32[]', space=smem, size = 0x4, offset = 0x4, fixed_abs, tag = 'smem constant byte address 0x4 - core index']
  #allocation1 [shape = 'u32[72,128]{1,0:T(1,128)}', space=vmem, size = 0x9000, scoped, tag = 'internal scratch']
  %s0 = inlined_call_operand.hbm [shape: f32[2,8,32], index: 0, kind: input, shape index: {}]
  %s1 = inlined_call_operand.hbm [shape: f32[2,1,8], index: 1, kind: input, shape index: {}]
  %s2 = inlined_call_operand.vmem [shape: f32[32,96], index: 2, kind: input, shape index: {}]
  %s3 = inlined_call_operand.vmem [shape: f32[1,96], index: 3, kind: input, shape index: {}]
  %s4 = inlined_call_operand.vmem [shape: f32[32,32], index: 4, kind: input, shape index: {}]
  %s5 = inlined_call_operand.vmem [shape: f32[1,32], index: 5, kind: input, shape index: {}]
  %s6 = inlined_call_operand.vmem [shape: f32[1,32], index: 6, kind: input, shape index: {}]
  %s7 = inlined_call_operand.vmem [shape: f32[1,32], index: 7, kind: input, shape index: {}]
  %s8 = inlined_call_operand.vmem [shape: f32[32,64], index: 8, kind: input, shape index: {}]
  %s9 = inlined_call_operand.vmem [shape: f32[1,64], index: 9, kind: input, shape index: {}]
  %s10 = inlined_call_operand.vmem [shape: f32[64,32], index: 10, kind: input, shape index: {}]
  %s11 = inlined_call_operand.vmem [shape: f32[1,32], index: 11, kind: input, shape index: {}]
  %s12 = inlined_call_operand.vmem [shape: f32[1,32], index: 12, kind: input, shape index: {}]
  %s13 = inlined_call_operand.vmem [shape: f32[1,32], index: 13, kind: input, shape index: {}]
  %s14 = inlined_call_operand.hbm [shape: f32[2,8,32], index: 14, kind: output, shape index: {}]
  %s15 = sld [smem:[#allocation0]]
  $region97: #{tpu_custom_call.1} parent=0
    _
  %s17 = ssub.s32 1, %s15
  %s18 = scalar_select 0, %s17, %s15
  $region1: #{tpu_custom_call.1} parent=0
    #allocation2 [shape = 'u8[8192]{0}', space=vmem, size = 0x2000, scoped, tag = 'input window, operand 0']
    #allocation3 [shape = 's32[2]{0}', space=sflag, size = 0x8, scoped, tag = 'scoped memory for tpu_custom_call.1']
    #allocation4 [shape = 's32[2]{0}', space=sflag, size = 0x8, scoped, tag = 'scoped memory for tpu_custom_call.1']
    #allocation5 [shape = 'u8[1024]{0}', space=vmem, size = 0x400, scoped, tag = 'input window, operand 1']
    #allocation6 [shape = 's32[2]{0}', space=sflag, size = 0x8, scoped, tag = 'scoped memory for tpu_custom_call.1']
    #allocation7 [shape = 'u8[8192]{0}', space=vmem, size = 0x2000, scoped, tag = 'output window, operand 0']
    %19 = vsyncpa [#allocation3], 0
    %s20 = scalar_lea.sflag [#allocation3], 1
    %21 = vsyncpa %s20, 0
    %22 = vsyncpa [#allocation6], 0
    %s23 = scalar_lea.sflag [#allocation6], 1
    %24 = vsyncpa %s23, 0
    %25 = vsyncpa [#allocation4], 0
    %s26 = scalar_lea.sflag [#allocation4], 1
    %27 = vsyncpa %s26, 0
    loop: start=0, step=1, limit=4
    $region2: #{tpu_custom_call.1} parent=1 // loop_pre_header
      _
    $region3: #{tpu_custom_call.1} parent=1 // loop_header
      %s29 = sphi 0, %s33
      %p30 = scmp.ge.s32.totalorder %s29, 4
      %s39 = sphi 0, %s41
      %s42 = sphi 0, %s39
      %s43 = sphi 0, %s42
      %s59 = sphi 0, %s43
      %s65 = sphi 0, %s67
      %s68 = sphi 0, %s65
      %s69 = sphi 0, %s68
      %s85 = sphi 0, %s69
      %s89 = sphi 0, %s89
      %s91 = sphi 0, %s89
      %s92 = sphi 0, %s91
      %s106 = sphi 0, %s92
      %s110 = sphi 0, %s110
      %s112 = sphi 0, %s110
      %s113 = sphi 0, %s112
      %s127 = sphi 0, %s113
      %s131 = sphi 0, %s131
      %s133 = sphi 0, %s131
      %s134 = sphi 0, %s133
      %s148 = sphi 0, %s134
      %s152 = sphi 0, %s152
      %s154 = sphi 0, %s152
      %s155 = sphi 0, %s154
      %s169 = sphi 0, %s155
      %s173 = sphi 0, %s173
      %s175 = sphi 0, %s173
      %s176 = sphi 0, %s175
      %s190 = sphi 0, %s176
      %s194 = sphi 0, %s194
      %s196 = sphi 0, %s194
      %s197 = sphi 0, %s196
      %s211 = sphi 0, %s197
      %s215 = sphi 0, %s215
      %s217 = sphi 0, %s215
      %s218 = sphi 0, %s217
      %s232 = sphi 0, %s218
      %s236 = sphi 0, %s236
      %s238 = sphi 0, %s236
      %s239 = sphi 0, %s238
      %s253 = sphi 0, %s239
      %s257 = sphi 0, %s257
      %s259 = sphi 0, %s257
      %s260 = sphi 0, %s259
      %s274 = sphi 0, %s260
      %s278 = sphi 0, %s278
      %s280 = sphi 0, %s278
      %s281 = sphi 0, %s280
      %s295 = sphi 0, %s281
      %s299 = sphi 0, %s299
      %s301 = sphi 0, %s299
      %s302 = sphi 0, %s301
      %s316 = sphi 0, %s302
      %s320 = sphi 0, %s320
      %s322 = sphi 0, %s320
      %s323 = sphi 0, %s322
      %s337 = sphi 0, %s323
      %s343 = sphi 0, %s345
      %s346 = sphi 0, %s343
      %s347 = sphi 0, %s346
      %s363 = sphi 0, %s347
    $region4: #{tpu_custom_call.1} parent=1 // loop_header_branch
      %32 = sbr.rel (%p30) target = $region8
    $region5: #{tpu_custom_call.1} parent=1 // loop_body
      %s34 = ssub.s32 %s29, 1
      %s35 = ssub.s32 %s29, 2
      %s36 = sadd.s32 %s29, 1
      %s37 = ssub.s32 %s29, %s36
      %p38 = scmp.eq.s32.totalorder %s37, 0
      %s40 = sadd.s32 %s39, 1
      %s41 = scalar_select %p38, %s39, %s40
      %p44 = pneg %p38
      %p45 = scmp.eq.s32.totalorder %s29, 1
      %p46 = por %p44, %p45
      %p47 = scmp.ne.s32.totalorder %s39, %s42
      %p48 = scmp.eq.s32.totalorder %s29, 0
      %p49 = por %p47, %p48
      %p50 = scmp.ne.s32.totalorder %s39, %s42
      %p51 = scmp.eq.s32.totalorder %s34, 1
      %p52 = por %p50, %p51
      %p53 = scmp.ne.s32.totalorder %s42, %s43
      %p54 = scmp.eq.s32.totalorder %s34, 0
      %p55 = por %p53, %p54
      %p56 = scmp.ne.s32.totalorder %s42, %s43
      %p57 = scmp.eq.s32.totalorder %s35, 1
      %p58 = por %p56, %p57
      %p60 = scmp.ne.s32.totalorder %s43, %s59
      %p61 = scmp.eq.s32.totalorder %s35, 0
      %p62 = por %p60, %p61
      %s63 = ssub.s32 %s29, %s36
      %p64 = scmp.eq.s32.totalorder %s63, 0
      %s66 = sadd.s32 %s65, 1
      %s67 = scalar_select %p64, %s65, %s66
      %p70 = pneg %p64
      %p71 = scmp.eq.s32.totalorder %s29, 1
      %p72 = por %p70, %p71
      %p73 = scmp.ne.s32.totalorder %s65, %s68
      %p74 = scmp.eq.s32.totalorder %s29, 0
      %p75 = por %p73, %p74
      %p76 = scmp.ne.s32.totalorder %s65, %s68
      %p77 = scmp.eq.s32.totalorder %s34, 1
      %p78 = por %p76, %p77
      %p79 = scmp.ne.s32.totalorder %s68, %s69
      %p80 = scmp.eq.s32.totalorder %s34, 0
      %p81 = por %p79, %p80
      %p82 = scmp.ne.s32.totalorder %s68, %s69
      %p83 = scmp.eq.s32.totalorder %s35, 1
      %p84 = por %p82, %p83
      %p86 = scmp.ne.s32.totalorder %s69, %s85
      %p87 = scmp.eq.s32.totalorder %s35, 0
      %p88 = por %p86, %p87
      %s90 = sadd.s32 %s89, 1
      %p93 = scmp.eq.s32.totalorder %s29, 1
      %p94 = scmp.ne.s32.totalorder %s89, %s91
      %p95 = scmp.eq.s32.totalorder %s29, 0
      %p96 = por %p94, %p95
      %p97 = scmp.ne.s32.totalorder %s89, %s91
      %p98 = scmp.eq.s32.totalorder %s34, 1
      %p99 = por %p97, %p98
      %p100 = scmp.ne.s32.totalorder %s91, %s92
      %p101 = scmp.eq.s32.totalorder %s34, 0
      %p102 = por %p100, %p101
      %p103 = scmp.ne.s32.totalorder %s91, %s92
      %p104 = scmp.eq.s32.totalorder %s35, 1
      %p105 = por %p103, %p104
      %p107 = scmp.ne.s32.totalorder %s92, %s106
      %p108 = scmp.eq.s32.totalorder %s35, 0
      %p109 = por %p107, %p108
      %s111 = sadd.s32 %s110, 1
      %p114 = scmp.eq.s32.totalorder %s29, 1
      %p115 = scmp.ne.s32.totalorder %s110, %s112
      %p116 = scmp.eq.s32.totalorder %s29, 0
      %p117 = por %p115, %p116
      %p118 = scmp.ne.s32.totalorder %s110, %s112
      %p119 = scmp.eq.s32.totalorder %s34, 1
      %p120 = por %p118, %p119
      %p121 = scmp.ne.s32.totalorder %s112, %s113
      %p122 = scmp.eq.s32.totalorder %s34, 0
      %p123 = por %p121, %p122
      %p124 = scmp.ne.s32.totalorder %s112, %s113
      %p125 = scmp.eq.s32.totalorder %s35, 1
      %p126 = por %p124, %p125
      %p128 = scmp.ne.s32.totalorder %s113, %s127
      %p129 = scmp.eq.s32.totalorder %s35, 0
      %p130 = por %p128, %p129
      %s132 = sadd.s32 %s131, 1
      %p135 = scmp.eq.s32.totalorder %s29, 1
      %p136 = scmp.ne.s32.totalorder %s131, %s133
      %p137 = scmp.eq.s32.totalorder %s29, 0
      %p138 = por %p136, %p137
      %p139 = scmp.ne.s32.totalorder %s131, %s133
      %p140 = scmp.eq.s32.totalorder %s34, 1
      %p141 = por %p139, %p140
      %p142 = scmp.ne.s32.totalorder %s133, %s134
      %p143 = scmp.eq.s32.totalorder %s34, 0
      %p144 = por %p142, %p143
      %p145 = scmp.ne.s32.totalorder %s133, %s134
      %p146 = scmp.eq.s32.totalorder %s35, 1
      %p147 = por %p145, %p146
      %p149 = scmp.ne.s32.totalorder %s134, %s148
      %p150 = scmp.eq.s32.totalorder %s35, 0
      %p151 = por %p149, %p150
      %s153 = sadd.s32 %s152, 1
      %p156 = scmp.eq.s32.totalorder %s29, 1
      %p157 = scmp.ne.s32.totalorder %s152, %s154
      %p158 = scmp.eq.s32.totalorder %s29, 0
      %p159 = por %p157, %p158
      %p160 = scmp.ne.s32.totalorder %s152, %s154
      %p161 = scmp.eq.s32.totalorder %s34, 1
      %p162 = por %p160, %p161
      %p163 = scmp.ne.s32.totalorder %s154, %s155
      %p164 = scmp.eq.s32.totalorder %s34, 0
      %p165 = por %p163, %p164
      %p166 = scmp.ne.s32.totalorder %s154, %s155
      %p167 = scmp.eq.s32.totalorder %s35, 1
      %p168 = por %p166, %p167
      %p170 = scmp.ne.s32.totalorder %s155, %s169
      %p171 = scmp.eq.s32.totalorder %s35, 0
      %p172 = por %p170, %p171
      %s174 = sadd.s32 %s173, 1
      %p177 = scmp.eq.s32.totalorder %s29, 1
      %p178 = scmp.ne.s32.totalorder %s173, %s175
      %p179 = scmp.eq.s32.totalorder %s29, 0
      %p180 = por %p178, %p179
      %p181 = scmp.ne.s32.totalorder %s173, %s175
      %p182 = scmp.eq.s32.totalorder %s34, 1
      %p183 = por %p181, %p182
      %p184 = scmp.ne.s32.totalorder %s175, %s176
      %p185 = scmp.eq.s32.totalorder %s34, 0
      %p186 = por %p184, %p185
      %p187 = scmp.ne.s32.totalorder %s175, %s176
      %p188 = scmp.eq.s32.totalorder %s35, 1
      %p189 = por %p187, %p188
      %p191 = scmp.ne.s32.totalorder %s176, %s190
      %p192 = scmp.eq.s32.totalorder %s35, 0
      %p193 = por %p191, %p192
      %s195 = sadd.s32 %s194, 1
      %p198 = scmp.eq.s32.totalorder %s29, 1
      %p199 = scmp.ne.s32.totalorder %s194, %s196
      %p200 = scmp.eq.s32.totalorder %s29, 0
      %p201 = por %p199, %p200
      %p202 = scmp.ne.s32.totalorder %s194, %s196
      %p203 = scmp.eq.s32.totalorder %s34, 1
      %p204 = por %p202, %p203
      %p205 = scmp.ne.s32.totalorder %s196, %s197
      %p206 = scmp.eq.s32.totalorder %s34, 0
      %p207 = por %p205, %p206
      %p208 = scmp.ne.s32.totalorder %s196, %s197
      %p209 = scmp.eq.s32.totalorder %s35, 1
      %p210 = por %p208, %p209
      %p212 = scmp.ne.s32.totalorder %s197, %s211
      %p213 = scmp.eq.s32.totalorder %s35, 0
      %p214 = por %p212, %p213
      %s216 = sadd.s32 %s215, 1
      %p219 = scmp.eq.s32.totalorder %s29, 1
      %p220 = scmp.ne.s32.totalorder %s215, %s217
      %p221 = scmp.eq.s32.totalorder %s29, 0
      %p222 = por %p220, %p221
      %p223 = scmp.ne.s32.totalorder %s215, %s217
      %p224 = scmp.eq.s32.totalorder %s34, 1
      %p225 = por %p223, %p224
      %p226 = scmp.ne.s32.totalorder %s217, %s218
      %p227 = scmp.eq.s32.totalorder %s34, 0
      %p228 = por %p226, %p227
      %p229 = scmp.ne.s32.totalorder %s217, %s218
      %p230 = scmp.eq.s32.totalorder %s35, 1
      %p231 = por %p229, %p230
      %p233 = scmp.ne.s32.totalorder %s218, %s232
      %p234 = scmp.eq.s32.totalorder %s35, 0
      %p235 = por %p233, %p234
      %s237 = sadd.s32 %s236, 1
      %p240 = scmp.eq.s32.totalorder %s29, 1
      %p241 = scmp.ne.s32.totalorder %s236, %s238
      %p242 = scmp.eq.s32.totalorder %s29, 0
      %p243 = por %p241, %p242
      %p244 = scmp.ne.s32.totalorder %s236, %s238
      %p245 = scmp.eq.s32.totalorder %s34, 1
      %p246 = por %p244, %p245
      %p247 = scmp.ne.s32.totalorder %s238, %s239
      %p248 = scmp.eq.s32.totalorder %s34, 0
      %p249 = por %p247, %p248
      %p250 = scmp.ne.s32.totalorder %s238, %s239
      %p251 = scmp.eq.s32.totalorder %s35, 1
      %p252 = por %p250, %p251
      %p254 = scmp.ne.s32.totalorder %s239, %s253
      %p255 = scmp.eq.s32.totalorder %s35, 0
      %p256 = por %p254, %p255
      %s258 = sadd.s32 %s257, 1
      %p261 = scmp.eq.s32.totalorder %s29, 1
      %p262 = scmp.ne.s32.totalorder %s257, %s259
      %p263 = scmp.eq.s32.totalorder %s29, 0
      %p264 = por %p262, %p263
      %p265 = scmp.ne.s32.totalorder %s257, %s259
      %p266 = scmp.eq.s32.totalorder %s34, 1
      %p267 = por %p265, %p266
      %p268 = scmp.ne.s32.totalorder %s259, %s260
      %p269 = scmp.eq.s32.totalorder %s34, 0
      %p270 = por %p268, %p269
      %p271 = scmp.ne.s32.totalorder %s259, %s260
      %p272 = scmp.eq.s32.totalorder %s35, 1
      %p273 = por %p271, %p272
      %p275 = scmp.ne.s32.totalorder %s260, %s274
      %p276 = scmp.eq.s32.totalorder %s35, 0
      %p277 = por %p275, %p276
      %s279 = sadd.s32 %s278, 1
      %p282 = scmp.eq.s32.totalorder %s29, 1
      %p283 = scmp.ne.s32.totalorder %s278, %s280
      %p284 = scmp.eq.s32.totalorder %s29, 0
      %p285 = por %p283, %p284
      %p286 = scmp.ne.s32.totalorder %s278, %s280
      %p287 = scmp.eq.s32.totalorder %s34, 1
      %p288 = por %p286, %p287
      %p289 = scmp.ne.s32.totalorder %s280, %s281
      %p290 = scmp.eq.s32.totalorder %s34, 0
      %p291 = por %p289, %p290
      %p292 = scmp.ne.s32.totalorder %s280, %s281
      %p293 = scmp.eq.s32.totalorder %s35, 1
      %p294 = por %p292, %p293
      %p296 = scmp.ne.s32.totalorder %s281, %s295
      %p297 = scmp.eq.s32.totalorder %s35, 0
      %p298 = por %p296, %p297
      %s300 = sadd.s32 %s299, 1
      %p303 = scmp.eq.s32.totalorder %s29, 1
      %p304 = scmp.ne.s32.totalorder %s299, %s301
      %p305 = scmp.eq.s32.totalorder %s29, 0
      %p306 = por %p304, %p305
      %p307 = scmp.ne.s32.totalorder %s299, %s301
      %p308 = scmp.eq.s32.totalorder %s34, 1
      %p309 = por %p307, %p308
      %p310 = scmp.ne.s32.totalorder %s301, %s302
      %p311 = scmp.eq.s32.totalorder %s34, 0
      %p312 = por %p310, %p311
      %p313 = scmp.ne.s32.totalorder %s301, %s302
      %p314 = scmp.eq.s32.totalorder %s35, 1
      %p315 = por %p313, %p314
      %p317 = scmp.ne.s32.totalorder %s302, %s316
      %p318 = scmp.eq.s32.totalorder %s35, 0
      %p319 = por %p317, %p318
      %s321 = sadd.s32 %s320, 1
      %p324 = scmp.eq.s32.totalorder %s29, 1
      %p325 = scmp.ne.s32.totalorder %s320, %s322
      %p326 = scmp.eq.s32.totalorder %s29, 0
      %p327 = por %p325, %p326
      %p328 = scmp.ne.s32.totalorder %s320, %s322
      %p329 = scmp.eq.s32.totalorder %s34, 1
      %p330 = por %p328, %p329
      %p331 = scmp.ne.s32.totalorder %s322, %s323
      %p332 = scmp.eq.s32.totalorder %s34, 0
      %p333 = por %p331, %p332
      %p334 = scmp.ne.s32.totalorder %s322, %s323
      %p335 = scmp.eq.s32.totalorder %s35, 1
      %p336 = por %p334, %p335
      %p338 = scmp.ne.s32.totalorder %s323, %s337
      %p339 = scmp.eq.s32.totalorder %s35, 0
      %p340 = por %p338, %p339
      %s341 = ssub.s32 %s29, %s36
      %p342 = scmp.eq.s32.totalorder %s341, 0
      %s344 = sadd.s32 %s343, 1
      %s345 = scalar_select %p342, %s343, %s344
      %p348 = pneg %p342
      %p349 = scmp.eq.s32.totalorder %s29, 1
      %p350 = por %p348, %p349
      %p351 = scmp.ne.s32.totalorder %s343, %s346
      %p352 = scmp.eq.s32.totalorder %s29, 0
      %p353 = por %p351, %p352
      %p354 = scmp.ne.s32.totalorder %s343, %s346
      %p355 = scmp.eq.s32.totalorder %s34, 1
      %p356 = por %p354, %p355
      %p357 = scmp.ne.s32.totalorder %s346, %s347
      %p358 = scmp.eq.s32.totalorder %s34, 0
      %p359 = por %p357, %p358
      %p360 = scmp.ne.s32.totalorder %s346, %s347
      %p361 = scmp.eq.s32.totalorder %s35, 1
      %p362 = por %p360, %p361
      %p364 = scmp.ne.s32.totalorder %s347, %s363
      %p365 = scmp.eq.s32.totalorder %s35, 0
      %p366 = por %p364, %p365
      %p367 = scmp.le.s32.totalorder 1, %s29
      %p368 = scmp.lt.s32.totalorder %s29, 3
      %p369 = pnand %p367, %p368
      %p370 = pneg %p369
      // Predicated region
      $region9: #{tpu_custom_call.1} parent=5 // pred_check
        _
      $region10: #{tpu_custom_call.1} parent=5 // pred_check_branch
        %372 = sbr.rel (%p369) target = $region12
      $region11: #{tpu_custom_call.1} parent=5 // pred_region
        %s373 = ssub.s32 %s29, 1
        // Predicated region
        $region13: #{tpu_custom_call.1} parent=11 // pred_check
          %p374 = pneg %p102
        $region14: #{tpu_custom_call.1} parent=11 // pred_check_branch
          %376 = sbr.rel (%p374) target = $region16
        $region15: #{tpu_custom_call.1} parent=11 // pred_region
          _
        $region16: #{tpu_custom_call.1} parent=11 // pred_fallthru
          _
        // Predicated region
        $region17: #{tpu_custom_call.1} parent=11 // pred_check
          %p377 = pneg %p123
        $region18: #{tpu_custom_call.1} parent=11 // pred_check_branch
          %379 = sbr.rel (%p377) target = $region20
        $region19: #{tpu_custom_call.1} parent=11 // pred_region
          _
        $region20: #{tpu_custom_call.1} parent=11 // pred_fallthru
          _
        // Predicated region
        $region21: #{tpu_custom_call.1} parent=11 // pred_check
          %p380 = pneg %p144
        $region22: #{tpu_custom_call.1} parent=11 // pred_check_branch
          %382 = sbr.rel (%p380) target = $region24
        $region23: #{tpu_custom_call.1} parent=11 // pred_region
          _
        $region24: #{tpu_custom_call.1} parent=11 // pred_fallthru
          _
        // Predicated region
        $region25: #{tpu_custom_call.1} parent=11 // pred_check
          %p383 = pneg %p165
        $region26: #{tpu_custom_call.1} parent=11 // pred_check_branch
          %385 = sbr.rel (%p383) target = $region28
        $region27: #{tpu_custom_call.1} parent=11 // pred_region
          _
        $region28: #{tpu_custom_call.1} parent=11 // pred_fallthru
          _
        // Predicated region
        $region29: #{tpu_custom_call.1} parent=11 // pred_check
          %p386 = pneg %p186
        $region30: #{tpu_custom_call.1} parent=11 // pred_check_branch
          %388 = sbr.rel (%p386) target = $region32
        $region31: #{tpu_custom_call.1} parent=11 // pred_region
          _
        $region32: #{tpu_custom_call.1} parent=11 // pred_fallthru
          _
        // Predicated region
        $region33: #{tpu_custom_call.1} parent=11 // pred_check
          %p389 = pneg %p207
        $region34: #{tpu_custom_call.1} parent=11 // pred_check_branch
          %391 = sbr.rel (%p389) target = $region36
        $region35: #{tpu_custom_call.1} parent=11 // pred_region
          _
        $region36: #{tpu_custom_call.1} parent=11 // pred_fallthru
          _
        // Predicated region
        $region37: #{tpu_custom_call.1} parent=11 // pred_check
          %p392 = pneg %p228
        $region38: #{tpu_custom_call.1} parent=11 // pred_check_branch
          %394 = sbr.rel (%p392) target = $region40
        $region39: #{tpu_custom_call.1} parent=11 // pred_region
          _
        $region40: #{tpu_custom_call.1} parent=11 // pred_fallthru
          _
        // Predicated region
        $region41: #{tpu_custom_call.1} parent=11 // pred_check
          %p395 = pneg %p249
        $region42: #{tpu_custom_call.1} parent=11 // pred_check_branch
          %397 = sbr.rel (%p395) target = $region44
        $region43: #{tpu_custom_call.1} parent=11 // pred_region
          _
        $region44: #{tpu_custom_call.1} parent=11 // pred_fallthru
          _
        // Predicated region
        $region45: #{tpu_custom_call.1} parent=11 // pred_check
          %p398 = pneg %p270
        $region46: #{tpu_custom_call.1} parent=11 // pred_check_branch
          %400 = sbr.rel (%p398) target = $region48
        $region47: #{tpu_custom_call.1} parent=11 // pred_region
          _
        $region48: #{tpu_custom_call.1} parent=11 // pred_fallthru
          _
        // Predicated region
        $region49: #{tpu_custom_call.1} parent=11 // pred_check
          %p401 = pneg %p291
        $region50: #{tpu_custom_call.1} parent=11 // pred_check_branch
          %403 = sbr.rel (%p401) target = $region52
        $region51: #{tpu_custom_call.1} parent=11 // pred_region
          _
        $region52: #{tpu_custom_call.1} parent=11 // pred_fallthru
          _
        // Predicated region
        $region53: #{tpu_custom_call.1} parent=11 // pred_check
          %p404 = pneg %p312
        $region54: #{tpu_custom_call.1} parent=11 // pred_check_branch
          %406 = sbr.rel (%p404) target = $region56
        $region55: #{tpu_custom_call.1} parent=11 // pred_region
          _
        $region56: #{tpu_custom_call.1} parent=11 // pred_fallthru
          _
        // Predicated region
        $region57: #{tpu_custom_call.1} parent=11 // pred_check
          %p407 = pneg %p333
        $region58: #{tpu_custom_call.1} parent=11 // pred_check_branch
          %409 = sbr.rel (%p407) target = $region60
        $region59: #{tpu_custom_call.1} parent=11 // pred_region
          _
        $region60: #{tpu_custom_call.1} parent=11 // pred_fallthru
          _
      $region12: #{tpu_custom_call.1} parent=5 // pred_fallthru
        _
      %p410 = scmp.lt.s32.totalorder %s29, 2
      // Predicated region
      $region61: #{tpu_custom_call.1} parent=5 // pred_check
        %p411 = pneg %p410
      $region62: #{tpu_custom_call.1} parent=5 // pred_check_branch
        %413 = sbr.rel (%p411) target = $region64
      $region63: #{tpu_custom_call.1} parent=5 // pred_region
        // Predicated region
        $region65: #{tpu_custom_call.1} parent=63 // pred_check
          %p414 = pneg %p49
        $region66: #{tpu_custom_call.1} parent=63 // pred_check_branch
          %416 = sbr.rel (%p414) target = $region68
        $region67: #{tpu_custom_call.1} parent=63 // pred_region
          %s417 = sand.u32 %s39, 1
          %s418 = scalar_lea.sflag [#allocation3], %s417
          %s419 = sand.u32 %s39, 1
          %s420 = smul.addr %s419, 8
          %s421 = scalar_lea.vmem [#allocation2], %s420
          %423 = vsyncadd %s418, 0
          %s424 = smul.addr %s29, 8
          %s425 = scalar_lea.hbm %s0, %s424
          %s427 = sshll.u32 %s425, 4
          %s428 = int_to_ptr.hbm [resolvable:$true] %s427
          %s429 = sshll.u32 %s421, 4
          %s430 = int_to_ptr.vmem [resolvable:$true] %s429
          %432 = dma.hbm_to_vmem [thread:$0]  %s428, 128, %s430, %s418
        $region68: #{tpu_custom_call.1} parent=63 // pred_fallthru
          _
        // Predicated region
        $region69: #{tpu_custom_call.1} parent=63 // pred_check
          %p433 = pneg %p75
        $region70: #{tpu_custom_call.1} parent=63 // pred_check_branch
          %435 = sbr.rel (%p433) target = $region72
        $region71: #{tpu_custom_call.1} parent=63 // pred_region
          %s436 = sand.u32 %s65, 1
          %s437 = scalar_lea.sflag [#allocation6], %s436
          %s438 = sand.u32 %s65, 1
          %s439 = scalar_lea.vmem [#allocation5], %s438
          %441 = vsyncadd %s437, 0
          %s442 = scalar_lea.hbm %s1, %s29
          %s444 = sshll.u32 %s442, 4
          %s445 = int_to_ptr.hbm [resolvable:$true] %s444
          %s446 = sshll.u32 %s439, 4
          %s447 = int_to_ptr.vmem [resolvable:$true] %s446
          %449 = dma.hbm_to_vmem [thread:$0]  %s445, 16, %s447, %s437
        $region72: #{tpu_custom_call.1} parent=63 // pred_fallthru
          _
      $region64: #{tpu_custom_call.1} parent=5 // pred_fallthru
        _
      %p450 = scmp.le.s32.totalorder 1, %s29
      %p451 = scmp.lt.s32.totalorder %s29, 3
      %p452 = pnand %p450, %p451
      %p453 = pneg %p452
      // Predicated region
      $region73: #{tpu_custom_call.1} parent=5 // pred_check
        _
      $region74: #{tpu_custom_call.1} parent=5 // pred_check_branch
        %455 = sbr.rel (%p452) target = $region76
      $region75: #{tpu_custom_call.1} parent=5 // pred_region
        %s456 = ssub.s32 %s29, 1
        %s457 = sand.u32 %s42, 1
        %s458 = scalar_lea.sflag [#allocation3], %s457
        %s459 = sand.u32 %s42, 1
        %s460 = smul.addr %s459, 8
        %s461 = scalar_lea.vmem [#allocation2], %s460
        // Predicated region
        $region77: #{tpu_custom_call.1} parent=75 // pred_check
          %p462 = pneg %p55
        $region78: #{tpu_custom_call.1} parent=75 // pred_check_branch
          %464 = sbr.rel (%p462) target = $region80
        $region79: #{tpu_custom_call.1} parent=75 // pred_region
          %466 = dma.done %s458, 128
        $region80: #{tpu_custom_call.1} parent=75 // pred_fallthru
          _
        %s467 = sand.u32 %s68, 1
        %s468 = scalar_lea.sflag [#allocation6], %s467
        %s469 = sand.u32 %s68, 1
        %s470 = scalar_lea.vmem [#allocation5], %s469
        // Predicated region
        $region81: #{tpu_custom_call.1} parent=75 // pred_check
          %p471 = pneg %p81
        $region82: #{tpu_custom_call.1} parent=75 // pred_check_branch
          %473 = sbr.rel (%p471) target = $region84
        $region83: #{tpu_custom_call.1} parent=75 // pred_region
          %475 = dma.done %s468, 16
        $region84: #{tpu_custom_call.1} parent=75 // pred_fallthru
          _
        %s476 = sand.u32 %s42, 1
        %s477 = scalar_lea.sflag [#allocation3], %s476
        %s478 = sand.u32 %s42, 1
        %s479 = smul.addr %s478, 8
        %s480 = scalar_lea.vmem [#allocation2], %s479
        %p481 = pneg %p55
        %p482 = pneg %p52
        %s483 = sand.u32 %s68, 1
        %s484 = scalar_lea.sflag [#allocation6], %s483
        %s485 = sand.u32 %s68, 1
        %s486 = scalar_lea.vmem [#allocation5], %s485
        %p487 = pneg %p81
        %p488 = pneg %p78
        %p489 = pneg %p102
        %p490 = pneg %p99
        %p491 = pneg %p123
        %p492 = pneg %p120
        %p493 = pneg %p144
        %p494 = pneg %p141
        %p495 = pneg %p165
        %p496 = pneg %p162
        %p497 = pneg %p186
        %p498 = pneg %p183
        %p499 = pneg %p207
        %p500 = pneg %p204
        %p501 = pneg %p228
        %p502 = pneg %p225
        %p503 = pneg %p249
        %p504 = pneg %p246
        %p505 = pneg %p270
        %p506 = pneg %p267
        %p507 = pneg %p291
        %p508 = pneg %p288
        %p509 = pneg %p312
        %p510 = pneg %p309
        %p511 = pneg %p333
        %p512 = pneg %p330
        %p513 = pneg %p359
        %p514 = pneg %p356
        %s515 = sand.u32 %s346, 1
        %s516 = scalar_lea.sflag [#allocation4], %s515
        %s517 = sand.u32 %s346, 1
        %s518 = smul.addr %s517, 8
        %s519 = scalar_lea.vmem [#allocation7], %s518
        %v521 = vld [vmem:[%s461] sm:$0xff]
        %v522 = vld [vmem:[%s470] sm:$0x1]
        %v523 = vpack.c.bf16 %v521, %v521
        %v524 = vld [vmem:[%s2] sm:$0xff]
        %v525 = vld [vmem:[%s2 + $0x8] sm:$0xff]
        %v526 = vld [vmem:[%s2 + $0x10] sm:$0xff]
        %v527 = vld [vmem:[%s2 + $0x18] sm:$0xff]
        %v528 = vpack.c.bf16 %v525, %v524
        %v529 = vpack.c.bf16 %v527, %v526
        %v530 = vld [vmem:[%s3] sm:$0x1]
        %v532 = vperm.slane %v530, 0
        %vm534 = vcmask 261120
        %v536 = vsel %vm534, %v523, 0
        %538 = vmatpush.bf16.msra.mxu0 0
        %539 = vmatpush.bf16.msra.mxu0 0
        %540 = vmatpush.bf16.msra.mxu0 0
        %541 = vmatpush.bf16.msra.mxu0 0
        %542 = vmatpush.bf16.msra.mxu0 0
        %543 = vmatpush.bf16.msra.mxu0 0
        %544 = vmatpush.bf16.msra.mxu0 %v529
        %545 = vmatpush.bf16.msra.mxu0 %v528
        %546 = vmatmul.bf16.gmra.mxu0 %v536
        %v547 = vpop.f32.mrf.mxu0
        %v548 = vadd.f32 %v532, %v547
        %v549 = vpop.f32.mrf.mxu0
        %550 = vdwg.mxu0
        %v551 = vmul.f32 %v548, 0.35355338
        %553 = vrot.lane.b32.xlu0 %v548, 96
        %v554 = vpop.permute.xlu0 %553
        %vm555 = vcmask 64512
        %v557 = vsel %vm555, %v551, 0
        %v559 = vsel %vm555, %v554, 0
        %561 = vmatpush.xpose.msra.mxu0 0.0
        %562 = vmatpush.xpose.msra.mxu0 0.0
        %563 = vmatpush.xpose.msra.mxu0 0.0
        %564 = vmatpush.xpose.msra.mxu0 0.0
        %565 = vmatpush.xpose.msra.mxu0 0.0
        %566 = vmatpush.xpose.msra.mxu0 0.0
        %567 = vmatpush.xpose.msra.mxu0 0.0
        %568 = vmatpush.xpose.msra.mxu0 0.0
        %569 = vmatpush.xpose.msra.mxu0 0.0
        %570 = vmatpush.xpose.msra.mxu0 0.0
        %571 = vmatpush.xpose.msra.mxu0 0.0
        %572 = vmatpush.xpose.msra.mxu0 0.0
        %573 = vmatpush.xpose.msra.mxu0 0.0
        %574 = vmatpush.xpose.msra.mxu0 0.0
        %575 = vmatpush.xpose.msra.mxu0 0.0
        %576 = vmatpush.xpose.msra.mxu0 %v559
        %577 = vmatmul.f32.gmra.mxu0 %v557
        %v578 = vpop.f32.mrf.mxu0
        %v579 = vadd.f32 0.0, %v578
        %580 = vdwg.mxu0
        %vm581 = vcmp.lt.f32.partialorder %v522, 0.5
        %v582 = vsel %vm581, 1, 0
        %v583 = vperm.slane %v582, 0
        %vm584 = vcmp.eq.s32.totalorder %v583, 1
        %v585 = vsel %vm584, -1e+10, %v579
        %v586 = vsel %vm555, %v585, -inf
        %587 = vmax.xlane.f32.xlu0 %v586
        %v588 = vpop.xlane.xlu0 %587
        %v589 = vsub.f32 %v585, %v588
        %v590 = vmul.f32 %v589, 1.442695
        %v591 = vpow.pop %v590
        %v592 = vsel %vm555, %v591, 0.0
        %593 = vadd.xlane.f32.xlu0 %v592
        %v594 = vpop.xlane.xlu0 %593
        %v595 = vrcp.pop %v594
        %v596 = vmul.f32 %v591, %v595
        %597 = vrot.lane.b32.xlu0 %v548, 64
        %v598 = vpop.permute.xlu0 %597
        %v601 = vsel %vm555, %v596, 0
        %603 = vmatpush.msra.mxu0 0.0
        %604 = vmatpush.msra.mxu0 0.0
        %605 = vmatpush.msra.mxu0 0.0
        %606 = vmatpush.msra.mxu0 0.0
        %607 = vmatpush.msra.mxu0 0.0
        %608 = vmatpush.msra.mxu0 0.0
        %609 = vmatpush.msra.mxu0 0.0
        %610 = vmatpush.msra.mxu0 0.0
        %611 = vmatpush.msra.mxu0 0.0
        %612 = vmatpush.msra.mxu0 0.0
        %613 = vmatpush.msra.mxu0 0.0
        %614 = vmatpush.msra.mxu0 0.0
        %615 = vmatpush.msra.mxu0 0.0
        %616 = vmatpush.msra.mxu0 0.0
        %617 = vmatpush.msra.mxu0 0.0
        %618 = vmatpush.msra.mxu0 %v598
        %619 = vmatmul.f32.gmra.mxu0 %v601
        %v620 = vpop.f32.mrf.mxu0
        %v621 = vadd.f32 0.0, %v620
        %622 = vdwg.mxu0
        %623 = vrot.lane.b32.xlu0 %v551, 120
        %v624 = vpop.permute.xlu0 %623
        %625 = vrot.lane.b32.xlu0 %v548, 88
        %v626 = vpop.permute.xlu0 %625
        %v627 = vsel %vm555, %v624, 0
        %v629 = vsel %vm555, %v626, 0
        %631 = vmatpush.xpose.msra.mxu0 0.0
        %632 = vmatpush.xpose.msra.mxu0 0.0
        %633 = vmatpush.xpose.msra.mxu0 0.0
        %634 = vmatpush.xpose.msra.mxu0 0.0
        %635 = vmatpush.xpose.msra.mxu0 0.0
        %636 = vmatpush.xpose.msra.mxu0 0.0
        %637 = vmatpush.xpose.msra.mxu0 0.0
        %638 = vmatpush.xpose.msra.mxu0 0.0
        %639 = vmatpush.xpose.msra.mxu0 0.0
        %640 = vmatpush.xpose.msra.mxu0 0.0
        %641 = vmatpush.xpose.msra.mxu0 0.0
        %642 = vmatpush.xpose.msra.mxu0 0.0
        %643 = vmatpush.xpose.msra.mxu0 0.0
        %644 = vmatpush.xpose.msra.mxu0 0.0
        %645 = vmatpush.xpose.msra.mxu0 0.0
        %646 = vmatpush.xpose.msra.mxu0 %v629
        %647 = vmatmul.f32.gmra.mxu0 %v627
        %v648 = vpop.f32.mrf.mxu0
        %v649 = vadd.f32 0.0, %v648
        %650 = vdwg.mxu0
        %v651 = vsel %vm584, -1e+10, %v649
        %v652 = vsel %vm555, %v651, -inf
        %653 = vmax.xlane.f32.xlu0 %v652
        %v654 = vpop.xlane.xlu0 %653
        %v655 = vsub.f32 %v651, %v654
        %v656 = vmul.f32 %v655, 1.442695
        %v657 = vpow.pop %v656
        %v658 = vsel %vm555, %v657, 0.0
        %659 = vadd.xlane.f32.xlu0 %v658
        %v660 = vpop.xlane.xlu0 %659
        %v661 = vrcp.pop %v660
        %v662 = vmul.f32 %v657, %v661
        %663 = vrot.lane.b32.xlu0 %v548, 56
        %v664 = vpop.permute.xlu0 %663
        %v667 = vsel %vm555, %v662, 0
        %669 = vmatpush.msra.mxu0 0.0
        %670 = vmatpush.msra.mxu0 0.0
        %671 = vmatpush.msra.mxu0 0.0
        %672 = vmatpush.msra.mxu0 0.0
        %673 = vmatpush.msra.mxu0 0.0
        %674 = vmatpush.msra.mxu0 0.0
        %675 = vmatpush.msra.mxu0 0.0
        %676 = vmatpush.msra.mxu0 0.0
        %677 = vmatpush.msra.mxu0 0.0
        %678 = vmatpush.msra.mxu0 0.0
        %679 = vmatpush.msra.mxu0 0.0
        %680 = vmatpush.msra.mxu0 0.0
        %681 = vmatpush.msra.mxu0 0.0
        %682 = vmatpush.msra.mxu0 0.0
        %683 = vmatpush.msra.mxu0 0.0
        %684 = vmatpush.msra.mxu0 %v664
        %685 = vmatmul.f32.gmra.mxu0 %v667
        %v686 = vpop.f32.mrf.mxu0
        %v687 = vadd.f32 0.0, %v686
        %688 = vdwg.mxu0
        %689 = vrot.lane.b32.xlu0 %v551, 112
        %v690 = vpop.permute.xlu0 %689
        %691 = vrot.lane.b32.xlu0 %v548, 80
        %v692 = vpop.permute.xlu0 %691
        %v693 = vsel %vm555, %v690, 0
        %v695 = vsel %vm555, %v692, 0
        %697 = vmatpush.xpose.msra.mxu0 0.0
        %698 = vmatpush.xpose.msra.mxu0 0.0
        %699 = vmatpush.xpose.msra.mxu0 0.0
        %700 = vmatpush.xpose.msra.mxu0 0.0
        %701 = vmatpush.xpose.msra.mxu0 0.0
        %702 = vmatpush.xpose.msra.mxu0 0.0
        %703 = vmatpush.xpose.msra.mxu0 0.0
        %704 = vmatpush.xpose.msra.mxu0 0.0
        %705 = vmatpush.xpose.msra.mxu0 0.0
        %706 = vmatpush.xpose.msra.mxu0 0.0
        %707 = vmatpush.xpose.msra.mxu0 0.0
        %708 = vmatpush.xpose.msra.mxu0 0.0
        %709 = vmatpush.xpose.msra.mxu0 0.0
        %710 = vmatpush.xpose.msra.mxu0 0.0
        %711 = vmatpush.xpose.msra.mxu0 0.0
        %712 = vmatpush.xpose.msra.mxu0 %v695
        %713 = vmatmul.f32.gmra.mxu0 %v693
        %v714 = vpop.f32.mrf.mxu0
        %v715 = vadd.f32 0.0, %v714
        %716 = vdwg.mxu0
        %v717 = vsel %vm584, -1e+10, %v715
        %v718 = vsel %vm555, %v717, -inf
        %719 = vmax.xlane.f32.xlu0 %v718
        %v720 = vpop.xlane.xlu0 %719
        %v721 = vsub.f32 %v717, %v720
        %v722 = vmul.f32 %v721, 1.442695
        %v723 = vpow.pop %v722
        %v724 = vsel %vm555, %v723, 0.0
        %725 = vadd.xlane.f32.xlu0 %v724
        %v726 = vpop.xlane.xlu0 %725
        %v727 = vrcp.pop %v726
        %v728 = vmul.f32 %v723, %v727
        %729 = vrot.lane.b32.xlu0 %v548, 48
        %v730 = vpop.permute.xlu0 %729
        %v733 = vsel %vm555, %v728, 0
        %735 = vmatpush.msra.mxu0 0.0
        %736 = vmatpush.msra.mxu0 0.0
        %737 = vmatpush.msra.mxu0 0.0
        %738 = vmatpush.msra.mxu0 0.0
        %739 = vmatpush.msra.mxu0 0.0
        %740 = vmatpush.msra.mxu0 0.0
        %741 = vmatpush.msra.mxu0 0.0
        %742 = vmatpush.msra.mxu0 0.0
        %743 = vmatpush.msra.mxu0 0.0
        %744 = vmatpush.msra.mxu0 0.0
        %745 = vmatpush.msra.mxu0 0.0
        %746 = vmatpush.msra.mxu0 0.0
        %747 = vmatpush.msra.mxu0 0.0
        %748 = vmatpush.msra.mxu0 0.0
        %749 = vmatpush.msra.mxu0 0.0
        %750 = vmatpush.msra.mxu0 %v730
        %751 = vmatmul.f32.gmra.mxu0 %v733
        %v752 = vpop.f32.mrf.mxu0
        %v753 = vadd.f32 0.0, %v752
        %754 = vdwg.mxu0
        %755 = vrot.lane.b32.xlu0 %v551, 104
        %v756 = vpop.permute.xlu0 %755
        %757 = vrot.lane.b32.xlu0 %v548, 72
        %v758 = vpop.permute.xlu0 %757
        %v759 = vsel %vm555, %v756, 0
        %v761 = vsel %vm555, %v758, 0
        %763 = vmatpush.xpose.msra.mxu0 0.0
        %764 = vmatpush.xpose.msra.mxu0 0.0
        %765 = vmatpush.xpose.msra.mxu0 0.0
        %766 = vmatpush.xpose.msra.mxu0 0.0
        %767 = vmatpush.xpose.msra.mxu0 0.0
        %768 = vmatpush.xpose.msra.mxu0 0.0
        %769 = vmatpush.xpose.msra.mxu0 0.0
        %770 = vmatpush.xpose.msra.mxu0 0.0
        %771 = vmatpush.xpose.msra.mxu0 0.0
        %772 = vmatpush.xpose.msra.mxu0 0.0
        %773 = vmatpush.xpose.msra.mxu0 0.0
        %774 = vmatpush.xpose.msra.mxu0 0.0
        %775 = vmatpush.xpose.msra.mxu0 0.0
        %776 = vmatpush.xpose.msra.mxu0 0.0
        %777 = vmatpush.xpose.msra.mxu0 0.0
        %778 = vmatpush.xpose.msra.mxu0 %v761
        %779 = vmatmul.f32.gmra.mxu0 %v759
        %v780 = vpop.f32.mrf.mxu0
        %v781 = vadd.f32 0.0, %v780
        %782 = vdwg.mxu0
        %v783 = vsel %vm584, -1e+10, %v781
        %v784 = vsel %vm555, %v783, -inf
        %785 = vmax.xlane.f32.xlu0 %v784
        %v786 = vpop.xlane.xlu0 %785
        %v787 = vsub.f32 %v783, %v786
        %v788 = vmul.f32 %v787, 1.442695
        %v789 = vpow.pop %v788
        %v790 = vsel %vm555, %v789, 0.0
        %791 = vadd.xlane.f32.xlu0 %v790
        %v792 = vpop.xlane.xlu0 %791
        %v793 = vrcp.pop %v792
        %v794 = vmul.f32 %v789, %v793
        %795 = vrot.lane.b32.xlu0 %v548, 40
        %v796 = vpop.permute.xlu0 %795
        %v799 = vsel %vm555, %v794, 0
        %801 = vmatpush.msra.mxu0 0.0
        %802 = vmatpush.msra.mxu0 0.0
        %803 = vmatpush.msra.mxu0 0.0
        %804 = vmatpush.msra.mxu0 0.0
        %805 = vmatpush.msra.mxu0 0.0
        %806 = vmatpush.msra.mxu0 0.0
        %807 = vmatpush.msra.mxu0 0.0
        %808 = vmatpush.msra.mxu0 0.0
        %809 = vmatpush.msra.mxu0 0.0
        %810 = vmatpush.msra.mxu0 0.0
        %811 = vmatpush.msra.mxu0 0.0
        %812 = vmatpush.msra.mxu0 0.0
        %813 = vmatpush.msra.mxu0 0.0
        %814 = vmatpush.msra.mxu0 0.0
        %815 = vmatpush.msra.mxu0 0.0
        %816 = vmatpush.msra.mxu0 %v796
        %817 = vmatmul.f32.gmra.mxu0 %v799
        %v818 = vpop.f32.mrf.mxu0
        %v819 = vadd.f32 0.0, %v818
        %820 = vdwg.mxu0
        %822 = vrot.lane.b32.xlu0 %v687, 8
        %v823 = vpop.permute.xlu0 %822
        %826 = vrot.lane.b32.xlu0 %v753, 16
        %v827 = vpop.permute.xlu0 %826
        %830 = vrot.lane.b32.xlu0 %v819, 24
        %v831 = vpop.permute.xlu0 %830
        %v833 = vsel %vm555, %v621, %v823
        %vm834 = vcmask 130048
        %v835 = vsel %vm834, %v833, %v827
        %vm836 = vcmask 195584
        %v837 = vsel %vm836, %v835, %v831
        %v838 = vpack.c.bf16 %v837, %v837
        %v839 = vld [vmem:[%s4] sm:$0xff]
        %v840 = vld [vmem:[%s4 + $0x8] sm:$0xff]
        %v841 = vld [vmem:[%s4 + $0x10] sm:$0xff]
        %v842 = vld [vmem:[%s4 + $0x18] sm:$0xff]
        %v843 = vpack.c.bf16 %v840, %v839
        %v844 = vpack.c.bf16 %v842, %v841
        %v845 = vld [vmem:[%s5] sm:$0x1]
        %v847 = vperm.slane %v845, 0
        %v850 = vsel %vm534, %v838, 0
        %852 = vmatpush.bf16.msra.mxu0 0
        %853 = vmatpush.bf16.msra.mxu0 0
        %854 = vmatpush.bf16.msra.mxu0 0
        %855 = vmatpush.bf16.msra.mxu0 0
        %856 = vmatpush.bf16.msra.mxu0 0
        %857 = vmatpush.bf16.msra.mxu0 0
        %858 = vmatpush.bf16.msra.mxu0 %v844
        %859 = vmatpush.bf16.msra.mxu0 %v843
        %860 = vmatmul.bf16.gmra.mxu0 %v850
        %v861 = vpop.f32.mrf.mxu0
        %v862 = vadd.f32 %v847, %v861
        %v863 = vpop.f32.mrf.mxu0
        %864 = vdwg.mxu0
        %v865 = vadd.f32 %v521, %v862
        %v866 = vld [vmem:[%s6] sm:$0x1]
        %v867 = vld [vmem:[%s7] sm:$0x1]
        %v868 = vsel %vm534, %v865, 0.0
        %869 = vadd.xlane.f32.xlu0 %v868
        %v870 = vpop.xlane.xlu0 %869
        %v871 = vrcp.pop 32.0
        %v872 = vmul.f32 32.0, %v871
        %v873 = vsub.f32 1.0, %v872
        %v874 = vmul.f32 %v871, %v873
        %v875 = vadd.f32 %v871, %v874
        %vm876 = vweird.f32 %v871
        %v877 = vsel %vm876, %v871, %v875
        %v878 = vmul.f32 %v870, %v877
        %v879 = vsub.f32 %v865, %v878
        %v880 = vmul.f32 %v879, %v879
        %v881 = vsel %vm534, %v880, 0.0
        %882 = vadd.xlane.f32.xlu0 %v881
        %v883 = vpop.xlane.xlu0 %882
        %v884 = vmul.f32 %v883, %v877
        %v885 = vadd.f32 %v884, 1e-05
        %v886 = vrsqrt.pop %v885
        %v887 = vmul.f32 %v886, %v885
        %v888 = vmul.f32 %v887, %v886
        %v889 = vmul.f32 0.5, %v888
        %v890 = vsub.f32 1.5, %v889
        %v891 = vmul.f32 %v886, %v890
        %vm892 = vweird.f32 %v885
        %vm893 = vweird.f32 %v886
        %vm894 = vmor %vm892, %vm893
        %v895 = vsel %vm894, %v886, %v891
        %v896 = vmul.f32 %v879, %v895
        %v898 = vperm.slane %v866, 0
        %v900 = vmul.f32 %v896, %v898
        %v902 = vperm.slane %v867, 0
        %v904 = vadd.f32 %v900, %v902
        %v905 = vpack.c.bf16 %v904, %v904
        %v906 = vld [vmem:[%s8] sm:$0xff]
        %v907 = vld [vmem:[%s8 + $0x8] sm:$0xff]
        %v908 = vld [vmem:[%s8 + $0x10] sm:$0xff]
        %v909 = vld [vmem:[%s8 + $0x18] sm:$0xff]
        %v910 = vpack.c.bf16 %v907, %v906
        %v911 = vpack.c.bf16 %v909, %v908
        %v912 = vld [vmem:[%s9] sm:$0x1]
        %v914 = vperm.slane %v912, 0
        %v917 = vsel %vm534, %v905, 0
        %919 = vmatpush.bf16.msra.mxu0 0
        %920 = vmatpush.bf16.msra.mxu0 0
        %921 = vmatpush.bf16.msra.mxu0 0
        %922 = vmatpush.bf16.msra.mxu0 0
        %923 = vmatpush.bf16.msra.mxu0 0
        %924 = vmatpush.bf16.msra.mxu0 0
        %925 = vmatpush.bf16.msra.mxu0 %v911
        %926 = vmatpush.bf16.msra.mxu0 %v910
        %927 = vmatmul.bf16.gmra.mxu0 %v917
        %v928 = vpop.f32.mrf.mxu0
        %v929 = vadd.f32 %v914, %v928
        %v930 = vpop.f32.mrf.mxu0
        %931 = vdwg.mxu0
        %v932 = vmax.f32 %v929, 0.0
        %v933 = vpack.c.bf16 %v932, %v932
        %v934 = vld [vmem:[%s10] sm:$0xff]
        %v935 = vld [vmem:[%s10 + $0x8] sm:$0xff]
        %v936 = vld [vmem:[%s10 + $0x10] sm:$0xff]
        %v937 = vld [vmem:[%s10 + $0x18] sm:$0xff]
        %v938 = vld [vmem:[%s10 + $0x20] sm:$0xff]
        %v939 = vld [vmem:[%s10 + $0x28] sm:$0xff]
        %v940 = vld [vmem:[%s10 + $0x30] sm:$0xff]
        %v941 = vld [vmem:[%s10 + $0x38] sm:$0xff]
        %v942 = vpack.c.bf16 %v935, %v934
        %v943 = vpack.c.bf16 %v937, %v936
        %v944 = vpack.c.bf16 %v939, %v938
        %v945 = vpack.c.bf16 %v941, %v940
        %v946 = vld [vmem:[%s11] sm:$0x1]
        %v948 = vperm.slane %v946, 0
        %vm950 = vcmask 523264
        %v952 = vsel %vm950, %v933, 0
        %954 = vmatpush.bf16.msra.mxu0 0
        %955 = vmatpush.bf16.msra.mxu0 0
        %956 = vmatpush.bf16.msra.mxu0 0
        %957 = vmatpush.bf16.msra.mxu0 0
        %958 = vmatpush.bf16.msra.mxu0 %v945
        %959 = vmatpush.bf16.msra.mxu0 %v944
        %960 = vmatpush.bf16.msra.mxu0 %v943
        %961 = vmatpush.bf16.msra.mxu0 %v942
        %962 = vmatmul.bf16.gmra.mxu0 %v952
        %v963 = vpop.f32.mrf.mxu0
        %v964 = vadd.f32 %v948, %v963
        %v965 = vpop.f32.mrf.mxu0
        %966 = vdwg.mxu0
        %v967 = vadd.f32 %v904, %v964
        %v968 = vld [vmem:[%s12] sm:$0x1]
        %v969 = vld [vmem:[%s13] sm:$0x1]
        %v970 = vsel %vm534, %v967, 0.0
        %971 = vadd.xlane.f32.xlu0 %v970
        %v972 = vpop.xlane.xlu0 %971
        %v973 = vmul.f32 %v972, %v877
        %v974 = vsub.f32 %v967, %v973
        %v975 = vmul.f32 %v974, %v974
        %v976 = vsel %vm534, %v975, 0.0
        %977 = vadd.xlane.f32.xlu0 %v976
        %v978 = vpop.xlane.xlu0 %977
        %v979 = vmul.f32 %v978, %v877
        %v980 = vadd.f32 %v979, 1e-05
        %v981 = vrsqrt.pop %v980
        %v982 = vmul.f32 %v981, %v980
        %v983 = vmul.f32 %v982, %v981
        %v984 = vmul.f32 0.5, %v983
        %v985 = vsub.f32 1.5, %v984
        %v986 = vmul.f32 %v981, %v985
        %vm987 = vweird.f32 %v980
        %vm988 = vweird.f32 %v981
        %vm989 = vmor %vm987, %vm988
        %v990 = vsel %vm989, %v981, %v986
        %v991 = vmul.f32 %v974, %v990
        %v993 = vperm.slane %v968, 0
        %v995 = vmul.f32 %v991, %v993
        %v997 = vperm.slane %v969, 0
        %v999 = vadd.f32 %v995, %v997
        %1000 = vst.msk [vmem:[%s519] sm:$0xff] %vm534, %v999
        %s1001 = sand.u32 %s346, 1
        %s1002 = scalar_lea.sflag [#allocation4], %s1001
        %s1003 = sand.u32 %s346, 1
        %s1004 = smul.addr %s1003, 8
        %s1005 = scalar_lea.vmem [#allocation7], %s1004
        // Predicated region
        $region85: #{tpu_custom_call.1} parent=75 // pred_check
          %p1006 = pneg %p356
        $region86: #{tpu_custom_call.1} parent=75 // pred_check_branch
          %1008 = sbr.rel (%p1006) target = $region88
        $region87: #{tpu_custom_call.1} parent=75 // pred_region
          %1010 = vsyncadd %s1002, 0
          %s1011 = smul.addr %s34, 8
          %s1012 = scalar_lea.hbm %s14, %s1011
          %s1014 = sshll.u32 %s1005, 4
          %s1015 = int_to_ptr.vmem [resolvable:$true] %s1014
          %s1016 = sshll.u32 %s1012, 4
          %s1017 = int_to_ptr.hbm [resolvable:$true] %s1016
          %1019 = dma.vmem_to_hbm [thread:$0]  %s1015, 128, %s1017, %s1002
        $region88: #{tpu_custom_call.1} parent=75 // pred_fallthru
          _
      $region76: #{tpu_custom_call.1} parent=5 // pred_fallthru
        _
      %p1020 = scmp.le.s32.totalorder 2, %s29
      // Predicated region
      $region89: #{tpu_custom_call.1} parent=5 // pred_check
        %p1021 = pneg %p1020
      $region90: #{tpu_custom_call.1} parent=5 // pred_check_branch
        %1023 = sbr.rel (%p1021) target = $region92
      $region91: #{tpu_custom_call.1} parent=5 // pred_region
        %s1024 = ssub.s32 %s29, 2
        // Predicated region
        $region93: #{tpu_custom_call.1} parent=91 // pred_check
          %p1025 = pneg %p362
        $region94: #{tpu_custom_call.1} parent=91 // pred_check_branch
          %1027 = sbr.rel (%p1025) target = $region96
        $region95: #{tpu_custom_call.1} parent=91 // pred_region
          %s1028 = sand.u32 %s347, 1
          %s1029 = scalar_lea.sflag [#allocation4], %s1028
          %s1030 = sand.u32 %s347, 1
          %s1031 = smul.addr %s1030, 8
          %s1032 = scalar_lea.vmem [#allocation7], %s1031
          %1034 = dma.done %s1029, 128
        $region96: #{tpu_custom_call.1} parent=91 // pred_fallthru
          _
      $region92: #{tpu_custom_call.1} parent=5 // pred_fallthru
        _
    $region6: #{tpu_custom_call.1} parent=1 // loop_footer
      %s33 = sadd.s32 1, %s29
    $region7: #{tpu_custom_call.1} parent=1 // loop_footer_branch
      %28 = sbr.rel target = $region3
    $region8: #{tpu_custom_call.1} parent=1 // loop_exit
      _
    %1035 = vsyncpa [#allocation3], 1
    %s1036 = scalar_lea.sflag [#allocation3], 1
    %1037 = vsyncpa %s1036, 1
    %1038 = vsyncpa [#allocation6], 1
    %s1039 = scalar_lea.sflag [#allocation6], 1
    %1040 = vsyncpa %s1039, 1
    %1041 = vsyncpa [#allocation4], 1
    %s1042 = scalar_lea.sflag [#allocation4], 1
    %1043 = vsyncpa %s1042, 1

</llo_original>
